<compile_context>
chip_gen: v6e
topology: v6e:2x2x1
jax: 0.10.0
libtpu: 0.0.40
codegen_flags: <defaults>
</compile_context>

<pallas_src>
import functools

import jax
import jax.numpy as jnp
from jax.experimental import pallas as pl
from jax.experimental.pallas import tpu as pltpu

_LANES = 128


def _round_up(a, m):
    return ((a + m - 1) // m) * m


def _monotonic_kernel(w_ref, b_ref, x_ref, o_ref, *, n_group, n_each):
    # w_ref : SMEM [n_group * n_each]  -- precomputed W_eff = signer*exp(clip(w))
    # b_ref : SMEM [n_group * n_each]  -- bias
    # x_ref : VMEM [TBr, 128]          -- batch laid out rows x lanes
    # o_ref : VMEM [TBr, 128]
    x = x_ref[...]
    result = None
    for g in range(n_group):
        gmax = None
        for e in range(n_each):
            idx = g * n_each + e
            v = x * w_ref[idx] + b_ref[idx]          # scalar-broadcast FMA (VPU)
            gmax = v if gmax is None else jnp.maximum(gmax, v)
        result = gmax if result is None else jnp.minimum(result, gmax)
    o_ref[...] = result


def monotonic_forward_pallas(x, weight, bias, signer, n_group, n_each, *,
                             tb_rows=512):
    """x: [n_batch, 1] -> [n_batch, 1] float32 (matches PyTorch monotonic_forward)."""
    n_batch = x.shape[0]
    d = n_group * n_each

    # Hoist the parameter transform out of the grid loop.
    w_eff = (signer.astype(jnp.float32).reshape(1, 1)
             * jnp.exp(jnp.clip(weight.astype(jnp.float32), -20.0, 20.0))
             ).reshape(d)
    b_flat = bias.astype(jnp.float32).reshape(d)

    # Batch-in-lanes layout: pad the batch and view it as [rows_padded, 128].
    rows = _round_up(max(n_batch, 1), _LANES) // _LANES
    if rows > 8:
        # Cap the row tile, keep it a multiple of 8, and aim for >= 2 grid steps.
        tbr = min(_round_up(tb_rows, 8), _round_up(-(-rows // 2), 8))
    else:
        tbr = 8
    rows_padded = _round_up(rows, tbr)
    n_padded = rows_padded * _LANES
    grid = rows_padded // tbr

    x_flat = x.reshape(-1).astype(jnp.float32)
    x_pad = jnp.pad(x_flat, (0, n_padded - n_batch)).reshape(rows_padded, _LANES)

    kernel = functools.partial(_monotonic_kernel, n_group=n_group, n_each=n_each)

    out = pl.pallas_call(
        kernel,
        out_shape=jax.ShapeDtypeStruct((rows_padded, _LANES), jnp.float32),
        grid_spec=pltpu.PrefetchScalarGridSpec(
            num_scalar_prefetch=0,
            grid=(grid,),
            in_specs=[
                pl.BlockSpec(memory_space=pltpu.MemorySpace.SMEM),  # W_eff
                pl.BlockSpec(memory_space=pltpu.MemorySpace.SMEM),  # bias
                pl.BlockSpec((tbr, _LANES), lambda i: (i, 0)),      # x tile
            ],
            out_specs=pl.BlockSpec((tbr, _LANES), lambda i: (i, 0)),
        ),
        compiler_params=pltpu.CompilerParams(
            dimension_semantics=("parallel",)),
    )(w_eff, b_flat, x_pad)

    return out.reshape(n_padded, 1)[:n_batch]


def monotonic_forward_ref(x, weight, bias, signer, n_group, n_each):
    """Pure-JAX reference mirroring the PyTorch monotonic_forward."""
    W = signer.reshape(1, 1) * jnp.exp(jnp.clip(weight, -20.0, 20.0))
    mid = (x * W + bias).reshape(x.shape[0], n_group, n_each)
    return jnp.min(jnp.max(mid, axis=-1), axis=-1, keepdims=True)


# TODO(synk): MonotonicNetwork.inv (MonotonicInv.apply) is a data-dependent
# candidate search with a custom backward; only the forward hot path is kernelized.

if __name__ == "__main__":
    n_group, n_each = 9, 10

    key = jax.random.PRNGKey(0)
    k_x, k_s, k_w, k_b, k_x2 = jax.random.split(key, 5)

    stdv = 1.0 / jnp.sqrt(jnp.float32(n_group * n_each))
    signer = jax.random.uniform(k_s, (1,), jnp.float32, minval=-0.1, maxval=0.1)
    weight = jax.random.uniform(k_w, (1, n_group * n_each), jnp.float32,
                                minval=-stdv, maxval=stdv)
    bias = jax.random.uniform(k_b, (1, n_group * n_each), jnp.float32,
                              minval=-stdv, maxval=stdv)

    # Small, non-multiple-of-128 batch (exercises the padded tail).
    n_batch = 37
    x = jax.random.uniform(k_x, (n_batch, 1), jnp.float32)
    out = jax.block_until_ready(
        monotonic_forward_pallas(x, weight, bias, signer, n_group, n_each))
    ref = monotonic_forward_ref(x, weight, bias, signer, n_group, n_each)
    assert out.shape == (n_batch, 1)
    assert jnp.allclose(out, ref, atol=1e-6, rtol=1e-6), (out, ref)

    # Slightly larger batch that produces a multi-step grid (2 parallel steps).
    n_batch2 = 2100
    x2 = jax.random.uniform(k_x2, (n_batch2, 1), jnp.float32)
    out2 = jax.block_until_ready(
        monotonic_forward_pallas(x2, weight, bias, signer, n_group, n_each))
    ref2 = monotonic_forward_ref(x2, weight, bias, signer, n_group, n_each)
    assert out2.shape == (n_batch2, 1)
    assert jnp.allclose(out2, ref2, atol=1e-6, rtol=1e-6)

    print("KERNEL_OK")
</pallas_src>

<mosaic_0001>
module attributes {stable_mosaic.version = 11 : i64} {
  func.func @_monotonic_kernel(%arg0: i32, %arg1: memref<90xf32, #tpu.memory_space<smem>>, %arg2: memref<90xf32, #tpu.memory_space<smem>>, %arg3: memref<8x128xf32, #tpu.memory_space<vmem>>, %arg4: memref<8x128xf32, #tpu.memory_space<vmem>>) attributes {dimension_semantics = [#tpu.dimension_semantics<parallel>], iteration_bounds = array<i64: 1>, scalar_prefetch = 0 : i64, scratch_operands = 0 : i64, tpu.core_type = #tpu.core_type<tc>, window_params = [{transform_indices = @transform_0, window_bounds = array<i64: 90>}, {transform_indices = @transform_1, window_bounds = array<i64: 90>}, {transform_indices = @transform_2, window_bounds = array<i64: 8, 128>}, {transform_indices = @transform_3, window_bounds = array<i64: 8, 128>}]} {
    %c0 = arith.constant 0 : index
    %c0_0 = arith.constant 0 : index
    %0 = vector.load %arg3[%c0, %c0_0] : memref<8x128xf32, #tpu.memory_space<vmem>>, vector<8x128xf32>
    %c0_1 = arith.constant 0 : index
    %1 = memref.load %arg1[%c0_1] : memref<90xf32, #tpu.memory_space<smem>>
    %2 = vector.broadcast %1 : f32 to vector<8x128xf32>
    %3 = arith.mulf %0, %2 : vector<8x128xf32>
    %c0_2 = arith.constant 0 : index
    %4 = memref.load %arg2[%c0_2] : memref<90xf32, #tpu.memory_space<smem>>
    %5 = vector.broadcast %4 : f32 to vector<8x128xf32>
    %6 = arith.addf %3, %5 : vector<8x128xf32>
    %c1 = arith.constant 1 : index
    %7 = memref.load %arg1[%c1] : memref<90xf32, #tpu.memory_space<smem>>
    %8 = vector.broadcast %7 : f32 to vector<8x128xf32>
    %9 = arith.mulf %0, %8 : vector<8x128xf32>
    %c1_3 = arith.constant 1 : index
    %10 = memref.load %arg2[%c1_3] : memref<90xf32, #tpu.memory_space<smem>>
    %11 = vector.broadcast %10 : f32 to vector<8x128xf32>
    %12 = arith.addf %9, %11 : vector<8x128xf32>
    %13 = arith.maximumf %6, %12 : vector<8x128xf32>
    %c2 = arith.constant 2 : index
    %14 = memref.load %arg1[%c2] : memref<90xf32, #tpu.memory_space<smem>>
    %15 = vector.broadcast %14 : f32 to vector<8x128xf32>
    %16 = arith.mulf %0, %15 : vector<8x128xf32>
    %c2_4 = arith.constant 2 : index
    %17 = memref.load %arg2[%c2_4] : memref<90xf32, #tpu.memory_space<smem>>
    %18 = vector.broadcast %17 : f32 to vector<8x128xf32>
    %19 = arith.addf %16, %18 : vector<8x128xf32>
    %20 = arith.maximumf %13, %19 : vector<8x128xf32>
    %c3 = arith.constant 3 : index
    %21 = memref.load %arg1[%c3] : memref<90xf32, #tpu.memory_space<smem>>
    %22 = vector.broadcast %21 : f32 to vector<8x128xf32>
    %23 = arith.mulf %0, %22 : vector<8x128xf32>
    %c3_5 = arith.constant 3 : index
    %24 = memref.load %arg2[%c3_5] : memref<90xf32, #tpu.memory_space<smem>>
    %25 = vector.broadcast %24 : f32 to vector<8x128xf32>
    %26 = arith.addf %23, %25 : vector<8x128xf32>
    %27 = arith.maximumf %20, %26 : vector<8x128xf32>
    %c4 = arith.constant 4 : index
    %28 = memref.load %arg1[%c4] : memref<90xf32, #tpu.memory_space<smem>>
    %29 = vector.broadcast %28 : f32 to vector<8x128xf32>
    %30 = arith.mulf %0, %29 : vector<8x128xf32>
    %c4_6 = arith.constant 4 : index
    %31 = memref.load %arg2[%c4_6] : memref<90xf32, #tpu.memory_space<smem>>
    %32 = vector.broadcast %31 : f32 to vector<8x128xf32>
    %33 = arith.addf %30, %32 : vector<8x128xf32>
    %34 = arith.maximumf %27, %33 : vector<8x128xf32>
    %c5 = arith.constant 5 : index
    %35 = memref.load %arg1[%c5] : memref<90xf32, #tpu.memory_space<smem>>
    %36 = vector.broadcast %35 : f32 to vector<8x128xf32>
    %37 = arith.mulf %0, %36 : vector<8x128xf32>
    %c5_7 = arith.constant 5 : index
    %38 = memref.load %arg2[%c5_7] : memref<90xf32, #tpu.memory_space<smem>>
    %39 = vector.broadcast %38 : f32 to vector<8x128xf32>
    %40 = arith.addf %37, %39 : vector<8x128xf32>
    %41 = arith.maximumf %34, %40 : vector<8x128xf32>
    %c6 = arith.constant 6 : index
    %42 = memref.load %arg1[%c6] : memref<90xf32, #tpu.memory_space<smem>>
    %43 = vector.broadcast %42 : f32 to vector<8x128xf32>
    %44 = arith.mulf %0, %43 : vector<8x128xf32>
    %c6_8 = arith.constant 6 : index
    %45 = memref.load %arg2[%c6_8] : memref<90xf32, #tpu.memory_space<smem>>
    %46 = vector.broadcast %45 : f32 to vector<8x128xf32>
    %47 = arith.addf %44, %46 : vector<8x128xf32>
    %48 = arith.maximumf %41, %47 : vector<8x128xf32>
    %c7 = arith.constant 7 : index
    %49 = memref.load %arg1[%c7] : memref<90xf32, #tpu.memory_space<smem>>
    %50 = vector.broadcast %49 : f32 to vector<8x128xf32>
    %51 = arith.mulf %0, %50 : vector<8x128xf32>
    %c7_9 = arith.constant 7 : index
    %52 = memref.load %arg2[%c7_9] : memref<90xf32, #tpu.memory_space<smem>>
    %53 = vector.broadcast %52 : f32 to vector<8x128xf32>
    %54 = arith.addf %51, %53 : vector<8x128xf32>
    %55 = arith.maximumf %48, %54 : vector<8x128xf32>
    %c8 = arith.constant 8 : index
    %56 = memref.load %arg1[%c8] : memref<90xf32, #tpu.memory_space<smem>>
    %57 = vector.broadcast %56 : f32 to vector<8x128xf32>
    %58 = arith.mulf %0, %57 : vector<8x128xf32>
    %c8_10 = arith.constant 8 : index
    %59 = memref.load %arg2[%c8_10] : memref<90xf32, #tpu.memory_space<smem>>
    %60 = vector.broadcast %59 : f32 to vector<8x128xf32>
    %61 = arith.addf %58, %60 : vector<8x128xf32>
    %62 = arith.maximumf %55, %61 : vector<8x128xf32>
    %c9 = arith.constant 9 : index
    %63 = memref.load %arg1[%c9] : memref<90xf32, #tpu.memory_space<smem>>
    %64 = vector.broadcast %63 : f32 to vector<8x128xf32>
    %65 = arith.mulf %0, %64 : vector<8x128xf32>
    %c9_11 = arith.constant 9 : index
    %66 = memref.load %arg2[%c9_11] : memref<90xf32, #tpu.memory_space<smem>>
    %67 = vector.broadcast %66 : f32 to vector<8x128xf32>
    %68 = arith.addf %65, %67 : vector<8x128xf32>
    %69 = arith.maximumf %62, %68 : vector<8x128xf32>
    %c10 = arith.constant 10 : index
    %70 = memref.load %arg1[%c10] : memref<90xf32, #tpu.memory_space<smem>>
    %71 = vector.broadcast %70 : f32 to vector<8x128xf32>
    %72 = arith.mulf %0, %71 : vector<8x128xf32>
    %c10_12 = arith.constant 10 : index
    %73 = memref.load %arg2[%c10_12] : memref<90xf32, #tpu.memory_space<smem>>
    %74 = vector.broadcast %73 : f32 to vector<8x128xf32>
    %75 = arith.addf %72, %74 : vector<8x128xf32>
    %c11 = arith.constant 11 : index
    %76 = memref.load %arg1[%c11] : memref<90xf32, #tpu.memory_space<smem>>
    %77 = vector.broadcast %76 : f32 to vector<8x128xf32>
    %78 = arith.mulf %0, %77 : vector<8x128xf32>
    %c11_13 = arith.constant 11 : index
    %79 = memref.load %arg2[%c11_13] : memref<90xf32, #tpu.memory_space<smem>>
    %80 = vector.broadcast %79 : f32 to vector<8x128xf32>
    %81 = arith.addf %78, %80 : vector<8x128xf32>
    %82 = arith.maximumf %75, %81 : vector<8x128xf32>
    %c12 = arith.constant 12 : index
    %83 = memref.load %arg1[%c12] : memref<90xf32, #tpu.memory_space<smem>>
    %84 = vector.broadcast %83 : f32 to vector<8x128xf32>
    %85 = arith.mulf %0, %84 : vector<8x128xf32>
    %c12_14 = arith.constant 12 : index
    %86 = memref.load %arg2[%c12_14] : memref<90xf32, #tpu.memory_space<smem>>
    %87 = vector.broadcast %86 : f32 to vector<8x128xf32>
    %88 = arith.addf %85, %87 : vector<8x128xf32>
    %89 = arith.maximumf %82, %88 : vector<8x128xf32>
    %c13 = arith.constant 13 : index
    %90 = memref.load %arg1[%c13] : memref<90xf32, #tpu.memory_space<smem>>
    %91 = vector.broadcast %90 : f32 to vector<8x128xf32>
    %92 = arith.mulf %0, %91 : vector<8x128xf32>
    %c13_15 = arith.constant 13 : index
    %93 = memref.load %arg2[%c13_15] : memref<90xf32, #tpu.memory_space<smem>>
    %94 = vector.broadcast %93 : f32 to vector<8x128xf32>
    %95 = arith.addf %92, %94 : vector<8x128xf32>
    %96 = arith.maximumf %89, %95 : vector<8x128xf32>
    %c14 = arith.constant 14 : index
    %97 = memref.load %arg1[%c14] : memref<90xf32, #tpu.memory_space<smem>>
    %98 = vector.broadcast %97 : f32 to vector<8x128xf32>
    %99 = arith.mulf %0, %98 : vector<8x128xf32>
    %c14_16 = arith.constant 14 : index
    %100 = memref.load %arg2[%c14_16] : memref<90xf32, #tpu.memory_space<smem>>
    %101 = vector.broadcast %100 : f32 to vector<8x128xf32>
    %102 = arith.addf %99, %101 : vector<8x128xf32>
    %103 = arith.maximumf %96, %102 : vector<8x128xf32>
    %c15 = arith.constant 15 : index
    %104 = memref.load %arg1[%c15] : memref<90xf32, #tpu.memory_space<smem>>
    %105 = vector.broadcast %104 : f32 to vector<8x128xf32>
    %106 = arith.mulf %0, %105 : vector<8x128xf32>
    %c15_17 = arith.constant 15 : index
    %107 = memref.load %arg2[%c15_17] : memref<90xf32, #tpu.memory_space<smem>>
    %108 = vector.broadcast %107 : f32 to vector<8x128xf32>
    %109 = arith.addf %106, %108 : vector<8x128xf32>
    %110 = arith.maximumf %103, %109 : vector<8x128xf32>
    %c16 = arith.constant 16 : index
    %111 = memref.load %arg1[%c16] : memref<90xf32, #tpu.memory_space<smem>>
    %112 = vector.broadcast %111 : f32 to vector<8x128xf32>
    %113 = arith.mulf %0, %112 : vector<8x128xf32>
    %c16_18 = arith.constant 16 : index
    %114 = memref.load %arg2[%c16_18] : memref<90xf32, #tpu.memory_space<smem>>
    %115 = vector.broadcast %114 : f32 to vector<8x128xf32>
    %116 = arith.addf %113, %115 : vector<8x128xf32>
    %117 = arith.maximumf %110, %116 : vector<8x128xf32>
    %c17 = arith.constant 17 : index
    %118 = memref.load %arg1[%c17] : memref<90xf32, #tpu.memory_space<smem>>
    %119 = vector.broadcast %118 : f32 to vector<8x128xf32>
    %120 = arith.mulf %0, %119 : vector<8x128xf32>
    %c17_19 = arith.constant 17 : index
    %121 = memref.load %arg2[%c17_19] : memref<90xf32, #tpu.memory_space<smem>>
    %122 = vector.broadcast %121 : f32 to vector<8x128xf32>
    %123 = arith.addf %120, %122 : vector<8x128xf32>
    %124 = arith.maximumf %117, %123 : vector<8x128xf32>
    %c18 = arith.constant 18 : index
    %125 = memref.load %arg1[%c18] : memref<90xf32, #tpu.memory_space<smem>>
    %126 = vector.broadcast %125 : f32 to vector<8x128xf32>
    %127 = arith.mulf %0, %126 : vector<8x128xf32>
    %c18_20 = arith.constant 18 : index
    %128 = memref.load %arg2[%c18_20] : memref<90xf32, #tpu.memory_space<smem>>
    %129 = vector.broadcast %128 : f32 to vector<8x128xf32>
    %130 = arith.addf %127, %129 : vector<8x128xf32>
    %131 = arith.maximumf %124, %130 : vector<8x128xf32>
    %c19 = arith.constant 19 : index
    %132 = memref.load %arg1[%c19] : memref<90xf32, #tpu.memory_space<smem>>
    %133 = vector.broadcast %132 : f32 to vector<8x128xf32>
    %134 = arith.mulf %0, %133 : vector<8x128xf32>
    %c19_21 = arith.constant 19 : index
    %135 = memref.load %arg2[%c19_21] : memref<90xf32, #tpu.memory_space<smem>>
    %136 = vector.broadcast %135 : f32 to vector<8x128xf32>
    %137 = arith.addf %134, %136 : vector<8x128xf32>
    %138 = arith.maximumf %131, %137 : vector<8x128xf32>
    %139 = arith.minimumf %69, %138 : vector<8x128xf32>
    %c20 = arith.constant 20 : index
    %140 = memref.load %arg1[%c20] : memref<90xf32, #tpu.memory_space<smem>>
    %141 = vector.broadcast %140 : f32 to vector<8x128xf32>
    %142 = arith.mulf %0, %141 : vector<8x128xf32>
    %c20_22 = arith.constant 20 : index
    %143 = memref.load %arg2[%c20_22] : memref<90xf32, #tpu.memory_space<smem>>
    %144 = vector.broadcast %143 : f32 to vector<8x128xf32>
    %145 = arith.addf %142, %144 : vector<8x128xf32>
    %c21 = arith.constant 21 : index
    %146 = memref.load %arg1[%c21] : memref<90xf32, #tpu.memory_space<smem>>
    %147 = vector.broadcast %146 : f32 to vector<8x128xf32>
    %148 = arith.mulf %0, %147 : vector<8x128xf32>
    %c21_23 = arith.constant 21 : index
    %149 = memref.load %arg2[%c21_23] : memref<90xf32, #tpu.memory_space<smem>>
    %150 = vector.broadcast %149 : f32 to vector<8x128xf32>
    %151 = arith.addf %148, %150 : vector<8x128xf32>
    %152 = arith.maximumf %145, %151 : vector<8x128xf32>
    %c22 = arith.constant 22 : index
    %153 = memref.load %arg1[%c22] : memref<90xf32, #tpu.memory_space<smem>>
    %154 = vector.broadcast %153 : f32 to vector<8x128xf32>
    %155 = arith.mulf %0, %154 : vector<8x128xf32>
    %c22_24 = arith.constant 22 : index
    %156 = memref.load %arg2[%c22_24] : memref<90xf32, #tpu.memory_space<smem>>
    %157 = vector.broadcast %156 : f32 to vector<8x128xf32>
    %158 = arith.addf %155, %157 : vector<8x128xf32>
    %159 = arith.maximumf %152, %158 : vector<8x128xf32>
    %c23 = arith.constant 23 : index
    %160 = memref.load %arg1[%c23] : memref<90xf32, #tpu.memory_space<smem>>
    %161 = vector.broadcast %160 : f32 to vector<8x128xf32>
    %162 = arith.mulf %0, %161 : vector<8x128xf32>
    %c23_25 = arith.constant 23 : index
    %163 = memref.load %arg2[%c23_25] : memref<90xf32, #tpu.memory_space<smem>>
    %164 = vector.broadcast %163 : f32 to vector<8x128xf32>
    %165 = arith.addf %162, %164 : vector<8x128xf32>
    %166 = arith.maximumf %159, %165 : vector<8x128xf32>
    %c24 = arith.constant 24 : index
    %167 = memref.load %arg1[%c24] : memref<90xf32, #tpu.memory_space<smem>>
    %168 = vector.broadcast %167 : f32 to vector<8x128xf32>
    %169 = arith.mulf %0, %168 : vector<8x128xf32>
    %c24_26 = arith.constant 24 : index
    %170 = memref.load %arg2[%c24_26] : memref<90xf32, #tpu.memory_space<smem>>
    %171 = vector.broadcast %170 : f32 to vector<8x128xf32>
    %172 = arith.addf %169, %171 : vector<8x128xf32>
    %173 = arith.maximumf %166, %172 : vector<8x128xf32>
    %c25 = arith.constant 25 : index
    %174 = memref.load %arg1[%c25] : memref<90xf32, #tpu.memory_space<smem>>
    %175 = vector.broadcast %174 : f32 to vector<8x128xf32>
    %176 = arith.mulf %0, %175 : vector<8x128xf32>
    %c25_27 = arith.constant 25 : index
    %177 = memref.load %arg2[%c25_27] : memref<90xf32, #tpu.memory_space<smem>>
    %178 = vector.broadcast %177 : f32 to vector<8x128xf32>
    %179 = arith.addf %176, %178 : vector<8x128xf32>
    %180 = arith.maximumf %173, %179 : vector<8x128xf32>
    %c26 = arith.constant 26 : index
    %181 = memref.load %arg1[%c26] : memref<90xf32, #tpu.memory_space<smem>>
    %182 = vector.broadcast %181 : f32 to vector<8x128xf32>
    %183 = arith.mulf %0, %182 : vector<8x128xf32>
    %c26_28 = arith.constant 26 : index
    %184 = memref.load %arg2[%c26_28] : memref<90xf32, #tpu.memory_space<smem>>
    %185 = vector.broadcast %184 : f32 to vector<8x128xf32>
    %186 = arith.addf %183, %185 : vector<8x128xf32>
    %187 = arith.maximumf %180, %186 : vector<8x128xf32>
    %c27 = arith.constant 27 : index
    %188 = memref.load %arg1[%c27] : memref<90xf32, #tpu.memory_space<smem>>
    %189 = vector.broadcast %188 : f32 to vector<8x128xf32>
    %190 = arith.mulf %0, %189 : vector<8x128xf32>
    %c27_29 = arith.constant 27 : index
    %191 = memref.load %arg2[%c27_29] : memref<90xf32, #tpu.memory_space<smem>>
    %192 = vector.broadcast %191 : f32 to vector<8x128xf32>
    %193 = arith.addf %190, %192 : vector<8x128xf32>
    %194 = arith.maximumf %187, %193 : vector<8x128xf32>
    %c28 = arith.constant 28 : index
    %195 = memref.load %arg1[%c28] : memref<90xf32, #tpu.memory_space<smem>>
    %196 = vector.broadcast %195 : f32 to vector<8x128xf32>
    %197 = arith.mulf %0, %196 : vector<8x128xf32>
    %c28_30 = arith.constant 28 : index
    %198 = memref.load %arg2[%c28_30] : memref<90xf32, #tpu.memory_space<smem>>
    %199 = vector.broadcast %198 : f32 to vector<8x128xf32>
    %200 = arith.addf %197, %199 : vector<8x128xf32>
    %201 = arith.maximumf %194, %200 : vector<8x128xf32>
    %c29 = arith.constant 29 : index
    %202 = memref.load %arg1[%c29] : memref<90xf32, #tpu.memory_space<smem>>
    %203 = vector.broadcast %202 : f32 to vector<8x128xf32>
    %204 = arith.mulf %0, %203 : vector<8x128xf32>
    %c29_31 = arith.constant 29 : index
    %205 = memref.load %arg2[%c29_31] : memref<90xf32, #tpu.memory_space<smem>>
    %206 = vector.broadcast %205 : f32 to vector<8x128xf32>
    %207 = arith.addf %204, %206 : vector<8x128xf32>
    %208 = arith.maximumf %201, %207 : vector<8x128xf32>
    %209 = arith.minimumf %139, %208 : vector<8x128xf32>
    %c30 = arith.constant 30 : index
    %210 = memref.load %arg1[%c30] : memref<90xf32, #tpu.memory_space<smem>>
    %211 = vector.broadcast %210 : f32 to vector<8x128xf32>
    %212 = arith.mulf %0, %211 : vector<8x128xf32>
    %c30_32 = arith.constant 30 : index
    %213 = memref.load %arg2[%c30_32] : memref<90xf32, #tpu.memory_space<smem>>
    %214 = vector.broadcast %213 : f32 to vector<8x128xf32>
    %215 = arith.addf %212, %214 : vector<8x128xf32>
    %c31 = arith.constant 31 : index
    %216 = memref.load %arg1[%c31] : memref<90xf32, #tpu.memory_space<smem>>
    %217 = vector.broadcast %216 : f32 to vector<8x128xf32>
    %218 = arith.mulf %0, %217 : vector<8x128xf32>
    %c31_33 = arith.constant 31 : index
    %219 = memref.load %arg2[%c31_33] : memref<90xf32, #tpu.memory_space<smem>>
    %220 = vector.broadcast %219 : f32 to vector<8x128xf32>
    %221 = arith.addf %218, %220 : vector<8x128xf32>
    %222 = arith.maximumf %215, %221 : vector<8x128xf32>
    %c32 = arith.constant 32 : index
    %223 = memref.load %arg1[%c32] : memref<90xf32, #tpu.memory_space<smem>>
    %224 = vector.broadcast %223 : f32 to vector<8x128xf32>
    %225 = arith.mulf %0, %224 : vector<8x128xf32>
    %c32_34 = arith.constant 32 : index
    %226 = memref.load %arg2[%c32_34] : memref<90xf32, #tpu.memory_space<smem>>
    %227 = vector.broadcast %226 : f32 to vector<8x128xf32>
    %228 = arith.addf %225, %227 : vector<8x128xf32>
    %229 = arith.maximumf %222, %228 : vector<8x128xf32>
    %c33 = arith.constant 33 : index
    %230 = memref.load %arg1[%c33] : memref<90xf32, #tpu.memory_space<smem>>
    %231 = vector.broadcast %230 : f32 to vector<8x128xf32>
    %232 = arith.mulf %0, %231 : vector<8x128xf32>
    %c33_35 = arith.constant 33 : index
    %233 = memref.load %arg2[%c33_35] : memref<90xf32, #tpu.memory_space<smem>>
    %234 = vector.broadcast %233 : f32 to vector<8x128xf32>
    %235 = arith.addf %232, %234 : vector<8x128xf32>
    %236 = arith.maximumf %229, %235 : vector<8x128xf32>
    %c34 = arith.constant 34 : index
    %237 = memref.load %arg1[%c34] : memref<90xf32, #tpu.memory_space<smem>>
    %238 = vector.broadcast %237 : f32 to vector<8x128xf32>
    %239 = arith.mulf %0, %238 : vector<8x128xf32>
    %c34_36 = arith.constant 34 : index
    %240 = memref.load %arg2[%c34_36] : memref<90xf32, #tpu.memory_space<smem>>
    %241 = vector.broadcast %240 : f32 to vector<8x128xf32>
    %242 = arith.addf %239, %241 : vector<8x128xf32>
    %243 = arith.maximumf %236, %242 : vector<8x128xf32>
    %c35 = arith.constant 35 : index
    %244 = memref.load %arg1[%c35] : memref<90xf32, #tpu.memory_space<smem>>
    %245 = vector.broadcast %244 : f32 to vector<8x128xf32>
    %246 = arith.mulf %0, %245 : vector<8x128xf32>
    %c35_37 = arith.constant 35 : index
    %247 = memref.load %arg2[%c35_37] : memref<90xf32, #tpu.memory_space<smem>>
    %248 = vector.broadcast %247 : f32 to vector<8x128xf32>
    %249 = arith.addf %246, %248 : vector<8x128xf32>
    %250 = arith.maximumf %243, %249 : vector<8x128xf32>
    %c36 = arith.constant 36 : index
    %251 = memref.load %arg1[%c36] : memref<90xf32, #tpu.memory_space<smem>>
    %252 = vector.broadcast %251 : f32 to vector<8x128xf32>
    %253 = arith.mulf %0, %252 : vector<8x128xf32>
    %c36_38 = arith.constant 36 : index
    %254 = memref.load %arg2[%c36_38] : memref<90xf32, #tpu.memory_space<smem>>
    %255 = vector.broadcast %254 : f32 to vector<8x128xf32>
    %256 = arith.addf %253, %255 : vector<8x128xf32>
    %257 = arith.maximumf %250, %256 : vector<8x128xf32>
    %c37 = arith.constant 37 : index
    %258 = memref.load %arg1[%c37] : memref<90xf32, #tpu.memory_space<smem>>
    %259 = vector.broadcast %258 : f32 to vector<8x128xf32>
    %260 = arith.mulf %0, %259 : vector<8x128xf32>
    %c37_39 = arith.constant 37 : index
    %261 = memref.load %arg2[%c37_39] : memref<90xf32, #tpu.memory_space<smem>>
    %262 = vector.broadcast %261 : f32 to vector<8x128xf32>
    %263 = arith.addf %260, %262 : vector<8x128xf32>
    %264 = arith.maximumf %257, %263 : vector<8x128xf32>
    %c38 = arith.constant 38 : index
    %265 = memref.load %arg1[%c38] : memref<90xf32, #tpu.memory_space<smem>>
    %266 = vector.broadcast %265 : f32 to vector<8x128xf32>
    %267 = arith.mulf %0, %266 : vector<8x128xf32>
    %c38_40 = arith.constant 38 : index
    %268 = memref.load %arg2[%c38_40] : memref<90xf32, #tpu.memory_space<smem>>
    %269 = vector.broadcast %268 : f32 to vector<8x128xf32>
    %270 = arith.addf %267, %269 : vector<8x128xf32>
    %271 = arith.maximumf %264, %270 : vector<8x128xf32>
    %c39 = arith.constant 39 : index
    %272 = memref.load %arg1[%c39] : memref<90xf32, #tpu.memory_space<smem>>
    %273 = vector.broadcast %272 : f32 to vector<8x128xf32>
    %274 = arith.mulf %0, %273 : vector<8x128xf32>
    %c39_41 = arith.constant 39 : index
    %275 = memref.load %arg2[%c39_41] : memref<90xf32, #tpu.memory_space<smem>>
    %276 = vector.broadcast %275 : f32 to vector<8x128xf32>
    %277 = arith.addf %274, %276 : vector<8x128xf32>
    %278 = arith.maximumf %271, %277 : vector<8x128xf32>
    %279 = arith.minimumf %209, %278 : vector<8x128xf32>
    %c40 = arith.constant 40 : index
    %280 = memref.load %arg1[%c40] : memref<90xf32, #tpu.memory_space<smem>>
    %281 = vector.broadcast %280 : f32 to vector<8x128xf32>
    %282 = arith.mulf %0, %281 : vector<8x128xf32>
    %c40_42 = arith.constant 40 : index
    %283 = memref.load %arg2[%c40_42] : memref<90xf32, #tpu.memory_space<smem>>
    %284 = vector.broadcast %283 : f32 to vector<8x128xf32>
    %285 = arith.addf %282, %284 : vector<8x128xf32>
    %c41 = arith.constant 41 : index
    %286 = memref.load %arg1[%c41] : memref<90xf32, #tpu.memory_space<smem>>
    %287 = vector.broadcast %286 : f32 to vector<8x128xf32>
    %288 = arith.mulf %0, %287 : vector<8x128xf32>
    %c41_43 = arith.constant 41 : index
    %289 = memref.load %arg2[%c41_43] : memref<90xf32, #tpu.memory_space<smem>>
    %290 = vector.broadcast %289 : f32 to vector<8x128xf32>
    %291 = arith.addf %288, %290 : vector<8x128xf32>
    %292 = arith.maximumf %285, %291 : vector<8x128xf32>
    %c42 = arith.constant 42 : index
    %293 = memref.load %arg1[%c42] : memref<90xf32, #tpu.memory_space<smem>>
    %294 = vector.broadcast %293 : f32 to vector<8x128xf32>
    %295 = arith.mulf %0, %294 : vector<8x128xf32>
    %c42_44 = arith.constant 42 : index
    %296 = memref.load %arg2[%c42_44] : memref<90xf32, #tpu.memory_space<smem>>
    %297 = vector.broadcast %296 : f32 to vector<8x128xf32>
    %298 = arith.addf %295, %297 : vector<8x128xf32>
    %299 = arith.maximumf %292, %298 : vector<8x128xf32>
    %c43 = arith.constant 43 : index
    %300 = memref.load %arg1[%c43] : memref<90xf32, #tpu.memory_space<smem>>
    %301 = vector.broadcast %300 : f32 to vector<8x128xf32>
    %302 = arith.mulf %0, %301 : vector<8x128xf32>
    %c43_45 = arith.constant 43 : index
    %303 = memref.load %arg2[%c43_45] : memref<90xf32, #tpu.memory_space<smem>>
    %304 = vector.broadcast %303 : f32 to vector<8x128xf32>
    %305 = arith.addf %302, %304 : vector<8x128xf32>
    %306 = arith.maximumf %299, %305 : vector<8x128xf32>
    %c44 = arith.constant 44 : index
    %307 = memref.load %arg1[%c44] : memref<90xf32, #tpu.memory_space<smem>>
    %308 = vector.broadcast %307 : f32 to vector<8x128xf32>
    %309 = arith.mulf %0, %308 : vector<8x128xf32>
    %c44_46 = arith.constant 44 : index
    %310 = memref.load %arg2[%c44_46] : memref<90xf32, #tpu.memory_space<smem>>
    %311 = vector.broadcast %310 : f32 to vector<8x128xf32>
    %312 = arith.addf %309, %311 : vector<8x128xf32>
    %313 = arith.maximumf %306, %312 : vector<8x128xf32>
    %c45 = arith.constant 45 : index
    %314 = memref.load %arg1[%c45] : memref<90xf32, #tpu.memory_space<smem>>
    %315 = vector.broadcast %314 : f32 to vector<8x128xf32>
    %316 = arith.mulf %0, %315 : vector<8x128xf32>
    %c45_47 = arith.constant 45 : index
    %317 = memref.load %arg2[%c45_47] : memref<90xf32, #tpu.memory_space<smem>>
    %318 = vector.broadcast %317 : f32 to vector<8x128xf32>
    %319 = arith.addf %316, %318 : vector<8x128xf32>
    %320 = arith.maximumf %313, %319 : vector<8x128xf32>
    %c46 = arith.constant 46 : index
    %321 = memref.load %arg1[%c46] : memref<90xf32, #tpu.memory_space<smem>>
    %322 = vector.broadcast %321 : f32 to vector<8x128xf32>
    %323 = arith.mulf %0, %322 : vector<8x128xf32>
    %c46_48 = arith.constant 46 : index
    %324 = memref.load %arg2[%c46_48] : memref<90xf32, #tpu.memory_space<smem>>
    %325 = vector.broadcast %324 : f32 to vector<8x128xf32>
    %326 = arith.addf %323, %325 : vector<8x128xf32>
    %327 = arith.maximumf %320, %326 : vector<8x128xf32>
    %c47 = arith.constant 47 : index
    %328 = memref.load %arg1[%c47] : memref<90xf32, #tpu.memory_space<smem>>
    %329 = vector.broadcast %328 : f32 to vector<8x128xf32>
    %330 = arith.mulf %0, %329 : vector<8x128xf32>
    %c47_49 = arith.constant 47 : index
    %331 = memref.load %arg2[%c47_49] : memref<90xf32, #tpu.memory_space<smem>>
    %332 = vector.broadcast %331 : f32 to vector<8x128xf32>
    %333 = arith.addf %330, %332 : vector<8x128xf32>
    %334 = arith.maximumf %327, %333 : vector<8x128xf32>
    %c48 = arith.constant 48 : index
    %335 = memref.load %arg1[%c48] : memref<90xf32, #tpu.memory_space<smem>>
    %336 = vector.broadcast %335 : f32 to vector<8x128xf32>
    %337 = arith.mulf %0, %336 : vector<8x128xf32>
    %c48_50 = arith.constant 48 : index
    %338 = memref.load %arg2[%c48_50] : memref<90xf32, #tpu.memory_space<smem>>
    %339 = vector.broadcast %338 : f32 to vector<8x128xf32>
    %340 = arith.addf %337, %339 : vector<8x128xf32>
    %341 = arith.maximumf %334, %340 : vector<8x128xf32>
    %c49 = arith.constant 49 : index
    %342 = memref.load %arg1[%c49] : memref<90xf32, #tpu.memory_space<smem>>
    %343 = vector.broadcast %342 : f32 to vector<8x128xf32>
    %344 = arith.mulf %0, %343 : vector<8x128xf32>
    %c49_51 = arith.constant 49 : index
    %345 = memref.load %arg2[%c49_51] : memref<90xf32, #tpu.memory_space<smem>>
    %346 = vector.broadcast %345 : f32 to vector<8x128xf32>
    %347 = arith.addf %344, %346 : vector<8x128xf32>
    %348 = arith.maximumf %341, %347 : vector<8x128xf32>
    %349 = arith.minimumf %279, %348 : vector<8x128xf32>
    %c50 = arith.constant 50 : index
    %350 = memref.load %arg1[%c50] : memref<90xf32, #tpu.memory_space<smem>>
    %351 = vector.broadcast %350 : f32 to vector<8x128xf32>
    %352 = arith.mulf %0, %351 : vector<8x128xf32>
    %c50_52 = arith.constant 50 : index
    %353 = memref.load %arg2[%c50_52] : memref<90xf32, #tpu.memory_space<smem>>
    %354 = vector.broadcast %353 : f32 to vector<8x128xf32>
    %355 = arith.addf %352, %354 : vector<8x128xf32>
    %c51 = arith.constant 51 : index
    %356 = memref.load %arg1[%c51] : memref<90xf32, #tpu.memory_space<smem>>
    %357 = vector.broadcast %356 : f32 to vector<8x128xf32>
    %358 = arith.mulf %0, %357 : vector<8x128xf32>
    %c51_53 = arith.constant 51 : index
    %359 = memref.load %arg2[%c51_53] : memref<90xf32, #tpu.memory_space<smem>>
    %360 = vector.broadcast %359 : f32 to vector<8x128xf32>
    %361 = arith.addf %358, %360 : vector<8x128xf32>
    %362 = arith.maximumf %355, %361 : vector<8x128xf32>
    %c52 = arith.constant 52 : index
    %363 = memref.load %arg1[%c52] : memref<90xf32, #tpu.memory_space<smem>>
    %364 = vector.broadcast %363 : f32 to vector<8x128xf32>
    %365 = arith.mulf %0, %364 : vector<8x128xf32>
    %c52_54 = arith.constant 52 : index
    %366 = memref.load %arg2[%c52_54] : memref<90xf32, #tpu.memory_space<smem>>
    %367 = vector.broadcast %366 : f32 to vector<8x128xf32>
    %368 = arith.addf %365, %367 : vector<8x128xf32>
    %369 = arith.maximumf %362, %368 : vector<8x128xf32>
    %c53 = arith.constant 53 : index
    %370 = memref.load %arg1[%c53] : memref<90xf32, #tpu.memory_space<smem>>
    %371 = vector.broadcast %370 : f32 to vector<8x128xf32>
    %372 = arith.mulf %0, %371 : vector<8x128xf32>
    %c53_55 = arith.constant 53 : index
    %373 = memref.load %arg2[%c53_55] : memref<90xf32, #tpu.memory_space<smem>>
    %374 = vector.broadcast %373 : f32 to vector<8x128xf32>
    %375 = arith.addf %372, %374 : vector<8x128xf32>
    %376 = arith.maximumf %369, %375 : vector<8x128xf32>
    %c54 = arith.constant 54 : index
    %377 = memref.load %arg1[%c54] : memref<90xf32, #tpu.memory_space<smem>>
    %378 = vector.broadcast %377 : f32 to vector<8x128xf32>
    %379 = arith.mulf %0, %378 : vector<8x128xf32>
    %c54_56 = arith.constant 54 : index
    %380 = memref.load %arg2[%c54_56] : memref<90xf32, #tpu.memory_space<smem>>
    %381 = vector.broadcast %380 : f32 to vector<8x128xf32>
    %382 = arith.addf %379, %381 : vector<8x128xf32>
    %383 = arith.maximumf %376, %382 : vector<8x128xf32>
    %c55 = arith.constant 55 : index
    %384 = memref.load %arg1[%c55] : memref<90xf32, #tpu.memory_space<smem>>
    %385 = vector.broadcast %384 : f32 to vector<8x128xf32>
    %386 = arith.mulf %0, %385 : vector<8x128xf32>
    %c55_57 = arith.constant 55 : index
    %387 = memref.load %arg2[%c55_57] : memref<90xf32, #tpu.memory_space<smem>>
    %388 = vector.broadcast %387 : f32 to vector<8x128xf32>
    %389 = arith.addf %386, %388 : vector<8x128xf32>
    %390 = arith.maximumf %383, %389 : vector<8x128xf32>
    %c56 = arith.constant 56 : index
    %391 = memref.load %arg1[%c56] : memref<90xf32, #tpu.memory_space<smem>>
    %392 = vector.broadcast %391 : f32 to vector<8x128xf32>
    %393 = arith.mulf %0, %392 : vector<8x128xf32>
    %c56_58 = arith.constant 56 : index
    %394 = memref.load %arg2[%c56_58] : memref<90xf32, #tpu.memory_space<smem>>
    %395 = vector.broadcast %394 : f32 to vector<8x128xf32>
    %396 = arith.addf %393, %395 : vector<8x128xf32>
    %397 = arith.maximumf %390, %396 : vector<8x128xf32>
    %c57 = arith.constant 57 : index
    %398 = memref.load %arg1[%c57] : memref<90xf32, #tpu.memory_space<smem>>
    %399 = vector.broadcast %398 : f32 to vector<8x128xf32>
    %400 = arith.mulf %0, %399 : vector<8x128xf32>
    %c57_59 = arith.constant 57 : index
    %401 = memref.load %arg2[%c57_59] : memref<90xf32, #tpu.memory_space<smem>>
    %402 = vector.broadcast %401 : f32 to vector<8x128xf32>
    %403 = arith.addf %400, %402 : vector<8x128xf32>
    %404 = arith.maximumf %397, %403 : vector<8x128xf32>
    %c58 = arith.constant 58 : index
    %405 = memref.load %arg1[%c58] : memref<90xf32, #tpu.memory_space<smem>>
    %406 = vector.broadcast %405 : f32 to vector<8x128xf32>
    %407 = arith.mulf %0, %406 : vector<8x128xf32>
    %c58_60 = arith.constant 58 : index
    %408 = memref.load %arg2[%c58_60] : memref<90xf32, #tpu.memory_space<smem>>
    %409 = vector.broadcast %408 : f32 to vector<8x128xf32>
    %410 = arith.addf %407, %409 : vector<8x128xf32>
    %411 = arith.maximumf %404, %410 : vector<8x128xf32>
    %c59 = arith.constant 59 : index
    %412 = memref.load %arg1[%c59] : memref<90xf32, #tpu.memory_space<smem>>
    %413 = vector.broadcast %412 : f32 to vector<8x128xf32>
    %414 = arith.mulf %0, %413 : vector<8x128xf32>
    %c59_61 = arith.constant 59 : index
    %415 = memref.load %arg2[%c59_61] : memref<90xf32, #tpu.memory_space<smem>>
    %416 = vector.broadcast %415 : f32 to vector<8x128xf32>
    %417 = arith.addf %414, %416 : vector<8x128xf32>
    %418 = arith.maximumf %411, %417 : vector<8x128xf32>
    %419 = arith.minimumf %349, %418 : vector<8x128xf32>
    %c60 = arith.constant 60 : index
    %420 = memref.load %arg1[%c60] : memref<90xf32, #tpu.memory_space<smem>>
    %421 = vector.broadcast %420 : f32 to vector<8x128xf32>
    %422 = arith.mulf %0, %421 : vector<8x128xf32>
    %c60_62 = arith.constant 60 : index
    %423 = memref.load %arg2[%c60_62] : memref<90xf32, #tpu.memory_space<smem>>
    %424 = vector.broadcast %423 : f32 to vector<8x128xf32>
    %425 = arith.addf %422, %424 : vector<8x128xf32>
    %c61 = arith.constant 61 : index
    %426 = memref.load %arg1[%c61] : memref<90xf32, #tpu.memory_space<smem>>
    %427 = vector.broadcast %426 : f32 to vector<8x128xf32>
    %428 = arith.mulf %0, %427 : vector<8x128xf32>
    %c61_63 = arith.constant 61 : index
    %429 = memref.load %arg2[%c61_63] : memref<90xf32, #tpu.memory_space<smem>>
    %430 = vector.broadcast %429 : f32 to vector<8x128xf32>
    %431 = arith.addf %428, %430 : vector<8x128xf32>
    %432 = arith.maximumf %425, %431 : vector<8x128xf32>
    %c62 = arith.constant 62 : index
    %433 = memref.load %arg1[%c62] : memref<90xf32, #tpu.memory_space<smem>>
    %434 = vector.broadcast %433 : f32 to vector<8x128xf32>
    %435 = arith.mulf %0, %434 : vector<8x128xf32>
    %c62_64 = arith.constant 62 : index
    %436 = memref.load %arg2[%c62_64] : memref<90xf32, #tpu.memory_space<smem>>
    %437 = vector.broadcast %436 : f32 to vector<8x128xf32>
    %438 = arith.addf %435, %437 : vector<8x128xf32>
    %439 = arith.maximumf %432, %438 : vector<8x128xf32>
    %c63 = arith.constant 63 : index
    %440 = memref.load %arg1[%c63] : memref<90xf32, #tpu.memory_space<smem>>
    %441 = vector.broadcast %440 : f32 to vector<8x128xf32>
    %442 = arith.mulf %0, %441 : vector<8x128xf32>
    %c63_65 = arith.constant 63 : index
    %443 = memref.load %arg2[%c63_65] : memref<90xf32, #tpu.memory_space<smem>>
    %444 = vector.broadcast %443 : f32 to vector<8x128xf32>
    %445 = arith.addf %442, %444 : vector<8x128xf32>
    %446 = arith.maximumf %439, %445 : vector<8x128xf32>
    %c64 = arith.constant 64 : index
    %447 = memref.load %arg1[%c64] : memref<90xf32, #tpu.memory_space<smem>>
    %448 = vector.broadcast %447 : f32 to vector<8x128xf32>
    %449 = arith.mulf %0, %448 : vector<8x128xf32>
    %c64_66 = arith.constant 64 : index
    %450 = memref.load %arg2[%c64_66] : memref<90xf32, #tpu.memory_space<smem>>
    %451 = vector.broadcast %450 : f32 to vector<8x128xf32>
    %452 = arith.addf %449, %451 : vector<8x128xf32>
    %453 = arith.maximumf %446, %452 : vector<8x128xf32>
    %c65 = arith.constant 65 : index
    %454 = memref.load %arg1[%c65] : memref<90xf32, #tpu.memory_space<smem>>
    %455 = vector.broadcast %454 : f32 to vector<8x128xf32>
    %456 = arith.mulf %0, %455 : vector<8x128xf32>
    %c65_67 = arith.constant 65 : index
    %457 = memref.load %arg2[%c65_67] : memref<90xf32, #tpu.memory_space<smem>>
    %458 = vector.broadcast %457 : f32 to vector<8x128xf32>
    %459 = arith.addf %456, %458 : vector<8x128xf32>
    %460 = arith.maximumf %453, %459 : vector<8x128xf32>
    %c66 = arith.constant 66 : index
    %461 = memref.load %arg1[%c66] : memref<90xf32, #tpu.memory_space<smem>>
    %462 = vector.broadcast %461 : f32 to vector<8x128xf32>
    %463 = arith.mulf %0, %462 : vector<8x128xf32>
    %c66_68 = arith.constant 66 : index
    %464 = memref.load %arg2[%c66_68] : memref<90xf32, #tpu.memory_space<smem>>
    %465 = vector.broadcast %464 : f32 to vector<8x128xf32>
    %466 = arith.addf %463, %465 : vector<8x128xf32>
    %467 = arith.maximumf %460, %466 : vector<8x128xf32>
    %c67 = arith.constant 67 : index
    %468 = memref.load %arg1[%c67] : memref<90xf32, #tpu.memory_space<smem>>
    %469 = vector.broadcast %468 : f32 to vector<8x128xf32>
    %470 = arith.mulf %0, %469 : vector<8x128xf32>
    %c67_69 = arith.constant 67 : index
    %471 = memref.load %arg2[%c67_69] : memref<90xf32, #tpu.memory_space<smem>>
    %472 = vector.broadcast %471 : f32 to vector<8x128xf32>
    %473 = arith.addf %470, %472 : vector<8x128xf32>
    %474 = arith.maximumf %467, %473 : vector<8x128xf32>
    %c68 = arith.constant 68 : index
    %475 = memref.load %arg1[%c68] : memref<90xf32, #tpu.memory_space<smem>>
    %476 = vector.broadcast %475 : f32 to vector<8x128xf32>
    %477 = arith.mulf %0, %476 : vector<8x128xf32>
    %c68_70 = arith.constant 68 : index
    %478 = memref.load %arg2[%c68_70] : memref<90xf32, #tpu.memory_space<smem>>
    %479 = vector.broadcast %478 : f32 to vector<8x128xf32>
    %480 = arith.addf %477, %479 : vector<8x128xf32>
    %481 = arith.maximumf %474, %480 : vector<8x128xf32>
    %c69 = arith.constant 69 : index
    %482 = memref.load %arg1[%c69] : memref<90xf32, #tpu.memory_space<smem>>
    %483 = vector.broadcast %482 : f32 to vector<8x128xf32>
    %484 = arith.mulf %0, %483 : vector<8x128xf32>
    %c69_71 = arith.constant 69 : index
    %485 = memref.load %arg2[%c69_71] : memref<90xf32, #tpu.memory_space<smem>>
    %486 = vector.broadcast %485 : f32 to vector<8x128xf32>
    %487 = arith.addf %484, %486 : vector<8x128xf32>
    %488 = arith.maximumf %481, %487 : vector<8x128xf32>
    %489 = arith.minimumf %419, %488 : vector<8x128xf32>
    %c70 = arith.constant 70 : index
    %490 = memref.load %arg1[%c70] : memref<90xf32, #tpu.memory_space<smem>>
    %491 = vector.broadcast %490 : f32 to vector<8x128xf32>
    %492 = arith.mulf %0, %491 : vector<8x128xf32>
    %c70_72 = arith.constant 70 : index
    %493 = memref.load %arg2[%c70_72] : memref<90xf32, #tpu.memory_space<smem>>
    %494 = vector.broadcast %493 : f32 to vector<8x128xf32>
    %495 = arith.addf %492, %494 : vector<8x128xf32>
    %c71 = arith.constant 71 : index
    %496 = memref.load %arg1[%c71] : memref<90xf32, #tpu.memory_space<smem>>
    %497 = vector.broadcast %496 : f32 to vector<8x128xf32>
    %498 = arith.mulf %0, %497 : vector<8x128xf32>
    %c71_73 = arith.constant 71 : index
    %499 = memref.load %arg2[%c71_73] : memref<90xf32, #tpu.memory_space<smem>>
    %500 = vector.broadcast %499 : f32 to vector<8x128xf32>
    %501 = arith.addf %498, %500 : vector<8x128xf32>
    %502 = arith.maximumf %495, %501 : vector<8x128xf32>
    %c72 = arith.constant 72 : index
    %503 = memref.load %arg1[%c72] : memref<90xf32, #tpu.memory_space<smem>>
    %504 = vector.broadcast %503 : f32 to vector<8x128xf32>
    %505 = arith.mulf %0, %504 : vector<8x128xf32>
    %c72_74 = arith.constant 72 : index
    %506 = memref.load %arg2[%c72_74] : memref<90xf32, #tpu.memory_space<smem>>
    %507 = vector.broadcast %506 : f32 to vector<8x128xf32>
    %508 = arith.addf %505, %507 : vector<8x128xf32>
    %509 = arith.maximumf %502, %508 : vector<8x128xf32>
    %c73 = arith.constant 73 : index
    %510 = memref.load %arg1[%c73] : memref<90xf32, #tpu.memory_space<smem>>
    %511 = vector.broadcast %510 : f32 to vector<8x128xf32>
    %512 = arith.mulf %0, %511 : vector<8x128xf32>
    %c73_75 = arith.constant 73 : index
    %513 = memref.load %arg2[%c73_75] : memref<90xf32, #tpu.memory_space<smem>>
    %514 = vector.broadcast %513 : f32 to vector<8x128xf32>
    %515 = arith.addf %512, %514 : vector<8x128xf32>
    %516 = arith.maximumf %509, %515 : vector<8x128xf32>
    %c74 = arith.constant 74 : index
    %517 = memref.load %arg1[%c74] : memref<90xf32, #tpu.memory_space<smem>>
    %518 = vector.broadcast %517 : f32 to vector<8x128xf32>
    %519 = arith.mulf %0, %518 : vector<8x128xf32>
    %c74_76 = arith.constant 74 : index
    %520 = memref.load %arg2[%c74_76] : memref<90xf32, #tpu.memory_space<smem>>
    %521 = vector.broadcast %520 : f32 to vector<8x128xf32>
    %522 = arith.addf %519, %521 : vector<8x128xf32>
    %523 = arith.maximumf %516, %522 : vector<8x128xf32>
    %c75 = arith.constant 75 : index
    %524 = memref.load %arg1[%c75] : memref<90xf32, #tpu.memory_space<smem>>
    %525 = vector.broadcast %524 : f32 to vector<8x128xf32>
    %526 = arith.mulf %0, %525 : vector<8x128xf32>
    %c75_77 = arith.constant 75 : index
    %527 = memref.load %arg2[%c75_77] : memref<90xf32, #tpu.memory_space<smem>>
    %528 = vector.broadcast %527 : f32 to vector<8x128xf32>
    %529 = arith.addf %526, %528 : vector<8x128xf32>
    %530 = arith.maximumf %523, %529 : vector<8x128xf32>
    %c76 = arith.constant 76 : index
    %531 = memref.load %arg1[%c76] : memref<90xf32, #tpu.memory_space<smem>>
    %532 = vector.broadcast %531 : f32 to vector<8x128xf32>
    %533 = arith.mulf %0, %532 : vector<8x128xf32>
    %c76_78 = arith.constant 76 : index
    %534 = memref.load %arg2[%c76_78] : memref<90xf32, #tpu.memory_space<smem>>
    %535 = vector.broadcast %534 : f32 to vector<8x128xf32>
    %536 = arith.addf %533, %535 : vector<8x128xf32>
    %537 = arith.maximumf %530, %536 : vector<8x128xf32>
    %c77 = arith.constant 77 : index
    %538 = memref.load %arg1[%c77] : memref<90xf32, #tpu.memory_space<smem>>
    %539 = vector.broadcast %538 : f32 to vector<8x128xf32>
    %540 = arith.mulf %0, %539 : vector<8x128xf32>
    %c77_79 = arith.constant 77 : index
    %541 = memref.load %arg2[%c77_79] : memref<90xf32, #tpu.memory_space<smem>>
    %542 = vector.broadcast %541 : f32 to vector<8x128xf32>
    %543 = arith.addf %540, %542 : vector<8x128xf32>
    %544 = arith.maximumf %537, %543 : vector<8x128xf32>
    %c78 = arith.constant 78 : index
    %545 = memref.load %arg1[%c78] : memref<90xf32, #tpu.memory_space<smem>>
    %546 = vector.broadcast %545 : f32 to vector<8x128xf32>
    %547 = arith.mulf %0, %546 : vector<8x128xf32>
    %c78_80 = arith.constant 78 : index
    %548 = memref.load %arg2[%c78_80] : memref<90xf32, #tpu.memory_space<smem>>
    %549 = vector.broadcast %548 : f32 to vector<8x128xf32>
    %550 = arith.addf %547, %549 : vector<8x128xf32>
    %551 = arith.maximumf %544, %550 : vector<8x128xf32>
    %c79 = arith.constant 79 : index
    %552 = memref.load %arg1[%c79] : memref<90xf32, #tpu.memory_space<smem>>
    %553 = vector.broadcast %552 : f32 to vector<8x128xf32>
    %554 = arith.mulf %0, %553 : vector<8x128xf32>
    %c79_81 = arith.constant 79 : index
    %555 = memref.load %arg2[%c79_81] : memref<90xf32, #tpu.memory_space<smem>>
    %556 = vector.broadcast %555 : f32 to vector<8x128xf32>
    %557 = arith.addf %554, %556 : vector<8x128xf32>
    %558 = arith.maximumf %551, %557 : vector<8x128xf32>
    %559 = arith.minimumf %489, %558 : vector<8x128xf32>
    %c80 = arith.constant 80 : index
    %560 = memref.load %arg1[%c80] : memref<90xf32, #tpu.memory_space<smem>>
    %561 = vector.broadcast %560 : f32 to vector<8x128xf32>
    %562 = arith.mulf %0, %561 : vector<8x128xf32>
    %c80_82 = arith.constant 80 : index
    %563 = memref.load %arg2[%c80_82] : memref<90xf32, #tpu.memory_space<smem>>
    %564 = vector.broadcast %563 : f32 to vector<8x128xf32>
    %565 = arith.addf %562, %564 : vector<8x128xf32>
    %c81 = arith.constant 81 : index
    %566 = memref.load %arg1[%c81] : memref<90xf32, #tpu.memory_space<smem>>
    %567 = vector.broadcast %566 : f32 to vector<8x128xf32>
    %568 = arith.mulf %0, %567 : vector<8x128xf32>
    %c81_83 = arith.constant 81 : index
    %569 = memref.load %arg2[%c81_83] : memref<90xf32, #tpu.memory_space<smem>>
    %570 = vector.broadcast %569 : f32 to vector<8x128xf32>
    %571 = arith.addf %568, %570 : vector<8x128xf32>
    %572 = arith.maximumf %565, %571 : vector<8x128xf32>
    %c82 = arith.constant 82 : index
    %573 = memref.load %arg1[%c82] : memref<90xf32, #tpu.memory_space<smem>>
    %574 = vector.broadcast %573 : f32 to vector<8x128xf32>
    %575 = arith.mulf %0, %574 : vector<8x128xf32>
    %c82_84 = arith.constant 82 : index
    %576 = memref.load %arg2[%c82_84] : memref<90xf32, #tpu.memory_space<smem>>
    %577 = vector.broadcast %576 : f32 to vector<8x128xf32>
    %578 = arith.addf %575, %577 : vector<8x128xf32>
    %579 = arith.maximumf %572, %578 : vector<8x128xf32>
    %c83 = arith.constant 83 : index
    %580 = memref.load %arg1[%c83] : memref<90xf32, #tpu.memory_space<smem>>
    %581 = vector.broadcast %580 : f32 to vector<8x128xf32>
    %582 = arith.mulf %0, %581 : vector<8x128xf32>
    %c83_85 = arith.constant 83 : index
    %583 = memref.load %arg2[%c83_85] : memref<90xf32, #tpu.memory_space<smem>>
    %584 = vector.broadcast %583 : f32 to vector<8x128xf32>
    %585 = arith.addf %582, %584 : vector<8x128xf32>
    %586 = arith.maximumf %579, %585 : vector<8x128xf32>
    %c84 = arith.constant 84 : index
    %587 = memref.load %arg1[%c84] : memref<90xf32, #tpu.memory_space<smem>>
    %588 = vector.broadcast %587 : f32 to vector<8x128xf32>
    %589 = arith.mulf %0, %588 : vector<8x128xf32>
    %c84_86 = arith.constant 84 : index
    %590 = memref.load %arg2[%c84_86] : memref<90xf32, #tpu.memory_space<smem>>
    %591 = vector.broadcast %590 : f32 to vector<8x128xf32>
    %592 = arith.addf %589, %591 : vector<8x128xf32>
    %593 = arith.maximumf %586, %592 : vector<8x128xf32>
    %c85 = arith.constant 85 : index
    %594 = memref.load %arg1[%c85] : memref<90xf32, #tpu.memory_space<smem>>
    %595 = vector.broadcast %594 : f32 to vector<8x128xf32>
    %596 = arith.mulf %0, %595 : vector<8x128xf32>
    %c85_87 = arith.constant 85 : index
    %597 = memref.load %arg2[%c85_87] : memref<90xf32, #tpu.memory_space<smem>>
    %598 = vector.broadcast %597 : f32 to vector<8x128xf32>
    %599 = arith.addf %596, %598 : vector<8x128xf32>
    %600 = arith.maximumf %593, %599 : vector<8x128xf32>
    %c86 = arith.constant 86 : index
    %601 = memref.load %arg1[%c86] : memref<90xf32, #tpu.memory_space<smem>>
    %602 = vector.broadcast %601 : f32 to vector<8x128xf32>
    %603 = arith.mulf %0, %602 : vector<8x128xf32>
    %c86_88 = arith.constant 86 : index
    %604 = memref.load %arg2[%c86_88] : memref<90xf32, #tpu.memory_space<smem>>
    %605 = vector.broadcast %604 : f32 to vector<8x128xf32>
    %606 = arith.addf %603, %605 : vector<8x128xf32>
    %607 = arith.maximumf %600, %606 : vector<8x128xf32>
    %c87 = arith.constant 87 : index
    %608 = memref.load %arg1[%c87] : memref<90xf32, #tpu.memory_space<smem>>
    %609 = vector.broadcast %608 : f32 to vector<8x128xf32>
    %610 = arith.mulf %0, %609 : vector<8x128xf32>
    %c87_89 = arith.constant 87 : index
    %611 = memref.load %arg2[%c87_89] : memref<90xf32, #tpu.memory_space<smem>>
    %612 = vector.broadcast %611 : f32 to vector<8x128xf32>
    %613 = arith.addf %610, %612 : vector<8x128xf32>
    %614 = arith.maximumf %607, %613 : vector<8x128xf32>
    %c88 = arith.constant 88 : index
    %615 = memref.load %arg1[%c88] : memref<90xf32, #tpu.memory_space<smem>>
    %616 = vector.broadcast %615 : f32 to vector<8x128xf32>
    %617 = arith.mulf %0, %616 : vector<8x128xf32>
    %c88_90 = arith.constant 88 : index
    %618 = memref.load %arg2[%c88_90] : memref<90xf32, #tpu.memory_space<smem>>
    %619 = vector.broadcast %618 : f32 to vector<8x128xf32>
    %620 = arith.addf %617, %619 : vector<8x128xf32>
    %621 = arith.maximumf %614, %620 : vector<8x128xf32>
    %c89 = arith.constant 89 : index
    %622 = memref.load %arg1[%c89] : memref<90xf32, #tpu.memory_space<smem>>
    %623 = vector.broadcast %622 : f32 to vector<8x128xf32>
    %624 = arith.mulf %0, %623 : vector<8x128xf32>
    %c89_91 = arith.constant 89 : index
    %625 = memref.load %arg2[%c89_91] : memref<90xf32, #tpu.memory_space<smem>>
    %626 = vector.broadcast %625 : f32 to vector<8x128xf32>
    %627 = arith.addf %624, %626 : vector<8x128xf32>
    %628 = arith.maximumf %621, %627 : vector<8x128xf32>
    %629 = arith.minimumf %559, %628 : vector<8x128xf32>
    %c0_92 = arith.constant 0 : index
    %c0_93 = arith.constant 0 : index
    %630 = vector.load %arg4[%c0_92, %c0_93] : memref<8x128xf32, #tpu.memory_space<vmem>>, vector<8x128xf32>
    tpu.vector_store %arg4[%c0_92, %c0_93], %629 {strides = array<i32>} : memref<8x128xf32, #tpu.memory_space<vmem>>, vector<8x128xf32>,
    return
  }
  func.func @transform_0(%arg0: i32) -> i32 {
    %c0_i32 = arith.constant 0 : i32
    %c0_i32_0 = arith.constant 0 : i32
    return %c0_i32 : i32
  }
  func.func @transform_1(%arg0: i32) -> i32 {
    %c0_i32 = arith.constant 0 : i32
    %c0_i32_0 = arith.constant 0 : i32
    return %c0_i32 : i32
  }
  func.func @transform_2(%arg0: i32) -> (i32, i32) {
    %c0_i32 = arith.constant 0 : i32
    %c0_i32_0 = arith.constant 0 : i32
    return %arg0, %c0_i32 : i32, i32
  }
  func.func @transform_3(%arg0: i32) -> (i32, i32) {
    %c0_i32 = arith.constant 0 : i32
    %c0_i32_0 = arith.constant 0 : i32
    return %arg0, %c0_i32 : i32, i32
  }
}

</mosaic_0001>

<llo_original>
// kernel: tpu_custom_call.1
$region0: #{tpu_custom_call.1}
  #allocation0 [shape = 'u32[]', space=smem, size = 0x4, offset = 0x4, fixed_abs, tag = 'smem constant byte address 0x4 - core index']
  #allocation1 [shape = 'u32[144,128]{1,0:T(1,128)}', space=vmem, size = 0x12000, scoped, tag = 'internal scratch']
  %s0 = inlined_call_operand.hbm [shape: f32[90], index: 0, kind: input, shape index: {}]
  %s1 = inlined_call_operand.vmem [shape: f32[90], index: 1, kind: input, shape index: {}]
  %s2 = inlined_call_operand.hbm [shape: f32[8,128], index: 2, kind: input, shape index: {}]
  %s3 = inlined_call_operand.hbm [shape: f32[8,128], index: 3, kind: output, shape index: {}]
  %s4 = sld [smem:[#allocation0]]
  $region34: #{tpu_custom_call.1} parent=0
    _
  %s6 = ssub.s32 1, %s4
  %s7 = scalar_select 0, %s6, %s4
  $region1: #{tpu_custom_call.1} parent=0
    #allocation2 [shape = 'u8[512]{0}', space=smem, size = 0x200, scoped, tag = 'input window, operand 0, single buffered']
    #allocation3 [shape = 's32[1]{0}', space=sflag, size = 0x4, scoped, tag = 'scoped memory for tpu_custom_call.1']
    #allocation4 [shape = 's32[1]{0}', space=sflag, size = 0x4, scoped, tag = 'scoped memory for tpu_custom_call.1']
    #allocation5 [shape = 's32[1]{0}', space=sflag, size = 0x4, scoped, tag = 'scoped memory for tpu_custom_call.1']
    #allocation6 [shape = 's32[1]{0}', space=sflag, size = 0x4, scoped, tag = 'scoped memory for tpu_custom_call.1']
    #allocation7 [shape = 'u8[512]{0}', space=smem, size = 0x200, scoped, tag = 'input window, operand 1, single buffered']
    #allocation8 [shape = 'u8[4096]{0}', space=vmem, size = 0x1000, scoped, tag = 'input window, operand 2, single buffered']
    #allocation9 [shape = 'u8[4096]{0}', space=vmem, size = 0x1000, scoped, tag = 'output window, operand 0, single buffered']
    %8 = vsyncpa [#allocation5], 0
    %9 = vsyncpa [#allocation6], 0
    %10 = vsyncpa [#allocation3], 0
    %11 = vsyncpa [#allocation4], 0
    // Predicated region
    $region2: #{tpu_custom_call.1} parent=1 // pred_check
      _
    $region3: #{tpu_custom_call.1} parent=1 // pred_check_branch
      %13 = sbr.rel (0) target = $region5
    $region4: #{tpu_custom_call.1} parent=1 // pred_region
      %s15 = ssub.s32 16, 16
      %16 = vsyncadd [#allocation5], %s15
      %19 = dma.hbm_to_smem %s0, 16, [#allocation2], [#allocation5]
    $region5: #{tpu_custom_call.1} parent=1 // pred_fallthru
      _
    // Predicated region
    $region6: #{tpu_custom_call.1} parent=1 // pred_check
      _
    $region7: #{tpu_custom_call.1} parent=1 // pred_check_branch
      %21 = sbr.rel (0) target = $region9
    $region8: #{tpu_custom_call.1} parent=1 // pred_region
      %s23 = ssub.s32 16, 16
      %24 = vsyncadd [#allocation6], %s23
      %s26 = sshll.u32 %s1, 4
      %s27 = int_to_ptr.vmem [resolvable:$true] %s26
      %29 = dma.vmem_to_smem %s27, 16, [#allocation7], [#allocation6]
    $region9: #{tpu_custom_call.1} parent=1 // pred_fallthru
      _
    // Predicated region
    $region10: #{tpu_custom_call.1} parent=1 // pred_check
      _
    $region11: #{tpu_custom_call.1} parent=1 // pred_check_branch
      %31 = sbr.rel (0) target = $region13
    $region12: #{tpu_custom_call.1} parent=1 // pred_region
      %s33 = ssub.s32 128, 128
      %34 = vsyncadd [#allocation3], %s33
      %s36 = sshll.u32 [#allocation8], 4
      %s37 = int_to_ptr.vmem [resolvable:$true] %s36
      %39 = dma.hbm_to_vmem [thread:$0]  %s2, 128, %s37, [#allocation3]
    $region13: #{tpu_custom_call.1} parent=1 // pred_fallthru
      _
    // Predicated region
    $region14: #{tpu_custom_call.1} parent=1 // pred_check
      _
    $region15: #{tpu_custom_call.1} parent=1 // pred_check_branch
      %41 = sbr.rel (0) target = $region17
    $region16: #{tpu_custom_call.1} parent=1 // pred_region
      %42 = dma.done [#allocation5], 16
    $region17: #{tpu_custom_call.1} parent=1 // pred_fallthru
      _
    // Predicated region
    $region18: #{tpu_custom_call.1} parent=1 // pred_check
      _
    $region19: #{tpu_custom_call.1} parent=1 // pred_check_branch
      %44 = sbr.rel (0) target = $region21
    $region20: #{tpu_custom_call.1} parent=1 // pred_region
      %45 = dma.done [#allocation6], 16
    $region21: #{tpu_custom_call.1} parent=1 // pred_fallthru
      _
    // Predicated region
    $region22: #{tpu_custom_call.1} parent=1 // pred_check
      _
    $region23: #{tpu_custom_call.1} parent=1 // pred_check_branch
      %47 = sbr.rel (0) target = $region25
    $region24: #{tpu_custom_call.1} parent=1 // pred_region
      %48 = dma.done [#allocation3], 128
    $region25: #{tpu_custom_call.1} parent=1 // pred_fallthru
      _
    %49 = sfence
    %v50 = vld [vmem:[#allocation8] sm:$0xff]
    %s51 = sld [smem:[#allocation2]]
    %v52 = vstv %s51
    %v53 = vmul.f32 %v50, %v52
    %s54 = sld [smem:[#allocation7]]
    %v55 = vstv %s54
    %v56 = vadd.f32 %v53, %v55
    %s57 = sld [smem:[#allocation2 + $0x1]]
    %v58 = vstv %s57
    %v59 = vmul.f32 %v50, %v58
    %s60 = sld [smem:[#allocation7 + $0x1]]
    %v61 = vstv %s60
    %v62 = vadd.f32 %v59, %v61
    %v63 = vmax.f32 %v56, %v62
    %s64 = sld [smem:[#allocation2 + $0x2]]
    %v65 = vstv %s64
    %v66 = vmul.f32 %v50, %v65
    %s67 = sld [smem:[#allocation7 + $0x2]]
    %v68 = vstv %s67
    %v69 = vadd.f32 %v66, %v68
    %v70 = vmax.f32 %v63, %v69
    %s71 = sld [smem:[#allocation2 + $0x3]]
    %v72 = vstv %s71
    %v73 = vmul.f32 %v50, %v72
    %s74 = sld [smem:[#allocation7 + $0x3]]
    %v75 = vstv %s74
    %v76 = vadd.f32 %v73, %v75
    %v77 = vmax.f32 %v70, %v76
    %s78 = sld [smem:[#allocation2 + $0x4]]
    %v79 = vstv %s78
    %v80 = vmul.f32 %v50, %v79
    %s81 = sld [smem:[#allocation7 + $0x4]]
    %v82 = vstv %s81
    %v83 = vadd.f32 %v80, %v82
    %v84 = vmax.f32 %v77, %v83
    %s85 = sld [smem:[#allocation2 + $0x5]]
    %v86 = vstv %s85
    %v87 = vmul.f32 %v50, %v86
    %s88 = sld [smem:[#allocation7 + $0x5]]
    %v89 = vstv %s88
    %v90 = vadd.f32 %v87, %v89
    %v91 = vmax.f32 %v84, %v90
    %s92 = sld [smem:[#allocation2 + $0x6]]
    %v93 = vstv %s92
    %v94 = vmul.f32 %v50, %v93
    %s95 = sld [smem:[#allocation7 + $0x6]]
    %v96 = vstv %s95
    %v97 = vadd.f32 %v94, %v96
    %v98 = vmax.f32 %v91, %v97
    %s99 = sld [smem:[#allocation2 + $0x7]]
    %v100 = vstv %s99
    %v101 = vmul.f32 %v50, %v100
    %s102 = sld [smem:[#allocation7 + $0x7]]
    %v103 = vstv %s102
    %v104 = vadd.f32 %v101, %v103
    %v105 = vmax.f32 %v98, %v104
    %s106 = sld [smem:[#allocation2 + $0x8]]
    %v107 = vstv %s106
    %v108 = vmul.f32 %v50, %v107
    %s109 = sld [smem:[#allocation7 + $0x8]]
    %v110 = vstv %s109
    %v111 = vadd.f32 %v108, %v110
    %v112 = vmax.f32 %v105, %v111
    %s113 = sld [smem:[#allocation2 + $0x9]]
    %v114 = vstv %s113
    %v115 = vmul.f32 %v50, %v114
    %s116 = sld [smem:[#allocation7 + $0x9]]
    %v117 = vstv %s116
    %v118 = vadd.f32 %v115, %v117
    %v119 = vmax.f32 %v112, %v118
    %s120 = sld [smem:[#allocation2 + $0xa]]
    %v121 = vstv %s120
    %v122 = vmul.f32 %v50, %v121
    %s123 = sld [smem:[#allocation7 + $0xa]]
    %v124 = vstv %s123
    %v125 = vadd.f32 %v122, %v124
    %s126 = sld [smem:[#allocation2 + $0xb]]
    %v127 = vstv %s126
    %v128 = vmul.f32 %v50, %v127
    %s129 = sld [smem:[#allocation7 + $0xb]]
    %v130 = vstv %s129
    %v131 = vadd.f32 %v128, %v130
    %v132 = vmax.f32 %v125, %v131
    %s133 = sld [smem:[#allocation2 + $0xc]]
    %v134 = vstv %s133
    %v135 = vmul.f32 %v50, %v134
    %s136 = sld [smem:[#allocation7 + $0xc]]
    %v137 = vstv %s136
    %v138 = vadd.f32 %v135, %v137
    %v139 = vmax.f32 %v132, %v138
    %s140 = sld [smem:[#allocation2 + $0xd]]
    %v141 = vstv %s140
    %v142 = vmul.f32 %v50, %v141
    %s143 = sld [smem:[#allocation7 + $0xd]]
    %v144 = vstv %s143
    %v145 = vadd.f32 %v142, %v144
    %v146 = vmax.f32 %v139, %v145
    %s147 = sld [smem:[#allocation2 + $0xe]]
    %v148 = vstv %s147
    %v149 = vmul.f32 %v50, %v148
    %s150 = sld [smem:[#allocation7 + $0xe]]
    %v151 = vstv %s150
    %v152 = vadd.f32 %v149, %v151
    %v153 = vmax.f32 %v146, %v152
    %s154 = sld [smem:[#allocation2 + $0xf]]
    %v155 = vstv %s154
    %v156 = vmul.f32 %v50, %v155
    %s157 = sld [smem:[#allocation7 + $0xf]]
    %v158 = vstv %s157
    %v159 = vadd.f32 %v156, %v158
    %v160 = vmax.f32 %v153, %v159
    %s161 = sld [smem:[#allocation2 + $0x10]]
    %v162 = vstv %s161
    %v163 = vmul.f32 %v50, %v162
    %s164 = sld [smem:[#allocation7 + $0x10]]
    %v165 = vstv %s164
    %v166 = vadd.f32 %v163, %v165
    %v167 = vmax.f32 %v160, %v166
    %s168 = sld [smem:[#allocation2 + $0x11]]
    %v169 = vstv %s168
    %v170 = vmul.f32 %v50, %v169
    %s171 = sld [smem:[#allocation7 + $0x11]]
    %v172 = vstv %s171
    %v173 = vadd.f32 %v170, %v172
    %v174 = vmax.f32 %v167, %v173
    %s175 = sld [smem:[#allocation2 + $0x12]]
    %v176 = vstv %s175
    %v177 = vmul.f32 %v50, %v176
    %s178 = sld [smem:[#allocation7 + $0x12]]
    %v179 = vstv %s178
    %v180 = vadd.f32 %v177, %v179
    %v181 = vmax.f32 %v174, %v180
    %s182 = sld [smem:[#allocation2 + $0x13]]
    %v183 = vstv %s182
    %v184 = vmul.f32 %v50, %v183
    %s185 = sld [smem:[#allocation7 + $0x13]]
    %v186 = vstv %s185
    %v187 = vadd.f32 %v184, %v186
    %v188 = vmax.f32 %v181, %v187
    %v189 = vmin.f32 %v119, %v188
    %s190 = sld [smem:[#allocation2 + $0x14]]
    %v191 = vstv %s190
    %v192 = vmul.f32 %v50, %v191
    %s193 = sld [smem:[#allocation7 + $0x14]]
    %v194 = vstv %s193
    %v195 = vadd.f32 %v192, %v194
    %s196 = sld [smem:[#allocation2 + $0x15]]
    %v197 = vstv %s196
    %v198 = vmul.f32 %v50, %v197
    %s199 = sld [smem:[#allocation7 + $0x15]]
    %v200 = vstv %s199
    %v201 = vadd.f32 %v198, %v200
    %v202 = vmax.f32 %v195, %v201
    %s203 = sld [smem:[#allocation2 + $0x16]]
    %v204 = vstv %s203
    %v205 = vmul.f32 %v50, %v204
    %s206 = sld [smem:[#allocation7 + $0x16]]
    %v207 = vstv %s206
    %v208 = vadd.f32 %v205, %v207
    %v209 = vmax.f32 %v202, %v208
    %s210 = sld [smem:[#allocation2 + $0x17]]
    %v211 = vstv %s210
    %v212 = vmul.f32 %v50, %v211
    %s213 = sld [smem:[#allocation7 + $0x17]]
    %v214 = vstv %s213
    %v215 = vadd.f32 %v212, %v214
    %v216 = vmax.f32 %v209, %v215
    %s217 = sld [smem:[#allocation2 + $0x18]]
    %v218 = vstv %s217
    %v219 = vmul.f32 %v50, %v218
    %s220 = sld [smem:[#allocation7 + $0x18]]
    %v221 = vstv %s220
    %v222 = vadd.f32 %v219, %v221
    %v223 = vmax.f32 %v216, %v222
    %s224 = sld [smem:[#allocation2 + $0x19]]
    %v225 = vstv %s224
    %v226 = vmul.f32 %v50, %v225
    %s227 = sld [smem:[#allocation7 + $0x19]]
    %v228 = vstv %s227
    %v229 = vadd.f32 %v226, %v228
    %v230 = vmax.f32 %v223, %v229
    %s231 = sld [smem:[#allocation2 + $0x1a]]
    %v232 = vstv %s231
    %v233 = vmul.f32 %v50, %v232
    %s234 = sld [smem:[#allocation7 + $0x1a]]
    %v235 = vstv %s234
    %v236 = vadd.f32 %v233, %v235
    %v237 = vmax.f32 %v230, %v236
    %s238 = sld [smem:[#allocation2 + $0x1b]]
    %v239 = vstv %s238
    %v240 = vmul.f32 %v50, %v239
    %s241 = sld [smem:[#allocation7 + $0x1b]]
    %v242 = vstv %s241
    %v243 = vadd.f32 %v240, %v242
    %v244 = vmax.f32 %v237, %v243
    %s245 = sld [smem:[#allocation2 + $0x1c]]
    %v246 = vstv %s245
    %v247 = vmul.f32 %v50, %v246
    %s248 = sld [smem:[#allocation7 + $0x1c]]
    %v249 = vstv %s248
    %v250 = vadd.f32 %v247, %v249
    %v251 = vmax.f32 %v244, %v250
    %s252 = sld [smem:[#allocation2 + $0x1d]]
    %v253 = vstv %s252
    %v254 = vmul.f32 %v50, %v253
    %s255 = sld [smem:[#allocation7 + $0x1d]]
    %v256 = vstv %s255
    %v257 = vadd.f32 %v254, %v256
    %v258 = vmax.f32 %v251, %v257
    %v259 = vmin.f32 %v189, %v258
    %s260 = sld [smem:[#allocation2 + $0x1e]]
    %v261 = vstv %s260
    %v262 = vmul.f32 %v50, %v261
    %s263 = sld [smem:[#allocation7 + $0x1e]]
    %v264 = vstv %s263
    %v265 = vadd.f32 %v262, %v264
    %s266 = sld [smem:[#allocation2 + $0x1f]]
    %v267 = vstv %s266
    %v268 = vmul.f32 %v50, %v267
    %s269 = sld [smem:[#allocation7 + $0x1f]]
    %v270 = vstv %s269
    %v271 = vadd.f32 %v268, %v270
    %v272 = vmax.f32 %v265, %v271
    %s273 = sld [smem:[#allocation2 + $0x20]]
    %v274 = vstv %s273
    %v275 = vmul.f32 %v50, %v274
    %s276 = sld [smem:[#allocation7 + $0x20]]
    %v277 = vstv %s276
    %v278 = vadd.f32 %v275, %v277
    %v279 = vmax.f32 %v272, %v278
    %s280 = sld [smem:[#allocation2 + $0x21]]
    %v281 = vstv %s280
    %v282 = vmul.f32 %v50, %v281
    %s283 = sld [smem:[#allocation7 + $0x21]]
    %v284 = vstv %s283
    %v285 = vadd.f32 %v282, %v284
    %v286 = vmax.f32 %v279, %v285
    %s287 = sld [smem:[#allocation2 + $0x22]]
    %v288 = vstv %s287
    %v289 = vmul.f32 %v50, %v288
    %s290 = sld [smem:[#allocation7 + $0x22]]
    %v291 = vstv %s290
    %v292 = vadd.f32 %v289, %v291
    %v293 = vmax.f32 %v286, %v292
    %s294 = sld [smem:[#allocation2 + $0x23]]
    %v295 = vstv %s294
    %v296 = vmul.f32 %v50, %v295
    %s297 = sld [smem:[#allocation7 + $0x23]]
    %v298 = vstv %s297
    %v299 = vadd.f32 %v296, %v298
    %v300 = vmax.f32 %v293, %v299
    %s301 = sld [smem:[#allocation2 + $0x24]]
    %v302 = vstv %s301
    %v303 = vmul.f32 %v50, %v302
    %s304 = sld [smem:[#allocation7 + $0x24]]
    %v305 = vstv %s304
    %v306 = vadd.f32 %v303, %v305
    %v307 = vmax.f32 %v300, %v306
    %s308 = sld [smem:[#allocation2 + $0x25]]
    %v309 = vstv %s308
    %v310 = vmul.f32 %v50, %v309
    %s311 = sld [smem:[#allocation7 + $0x25]]
    %v312 = vstv %s311
    %v313 = vadd.f32 %v310, %v312
    %v314 = vmax.f32 %v307, %v313
    %s315 = sld [smem:[#allocation2 + $0x26]]
    %v316 = vstv %s315
    %v317 = vmul.f32 %v50, %v316
    %s318 = sld [smem:[#allocation7 + $0x26]]
    %v319 = vstv %s318
    %v320 = vadd.f32 %v317, %v319
    %v321 = vmax.f32 %v314, %v320
    %s322 = sld [smem:[#allocation2 + $0x27]]
    %v323 = vstv %s322
    %v324 = vmul.f32 %v50, %v323
    %s325 = sld [smem:[#allocation7 + $0x27]]
    %v326 = vstv %s325
    %v327 = vadd.f32 %v324, %v326
    %v328 = vmax.f32 %v321, %v327
    %v329 = vmin.f32 %v259, %v328
    %s330 = sld [smem:[#allocation2 + $0x28]]
    %v331 = vstv %s330
    %v332 = vmul.f32 %v50, %v331
    %s333 = sld [smem:[#allocation7 + $0x28]]
    %v334 = vstv %s333
    %v335 = vadd.f32 %v332, %v334
    %s336 = sld [smem:[#allocation2 + $0x29]]
    %v337 = vstv %s336
    %v338 = vmul.f32 %v50, %v337
    %s339 = sld [smem:[#allocation7 + $0x29]]
    %v340 = vstv %s339
    %v341 = vadd.f32 %v338, %v340
    %v342 = vmax.f32 %v335, %v341
    %s343 = sld [smem:[#allocation2 + $0x2a]]
    %v344 = vstv %s343
    %v345 = vmul.f32 %v50, %v344
    %s346 = sld [smem:[#allocation7 + $0x2a]]
    %v347 = vstv %s346
    %v348 = vadd.f32 %v345, %v347
    %v349 = vmax.f32 %v342, %v348
    %s350 = sld [smem:[#allocation2 + $0x2b]]
    %v351 = vstv %s350
    %v352 = vmul.f32 %v50, %v351
    %s353 = sld [smem:[#allocation7 + $0x2b]]
    %v354 = vstv %s353
    %v355 = vadd.f32 %v352, %v354
    %v356 = vmax.f32 %v349, %v355
    %s357 = sld [smem:[#allocation2 + $0x2c]]
    %v358 = vstv %s357
    %v359 = vmul.f32 %v50, %v358
    %s360 = sld [smem:[#allocation7 + $0x2c]]
    %v361 = vstv %s360
    %v362 = vadd.f32 %v359, %v361
    %v363 = vmax.f32 %v356, %v362
    %s364 = sld [smem:[#allocation2 + $0x2d]]
    %v365 = vstv %s364
    %v366 = vmul.f32 %v50, %v365
    %s367 = sld [smem:[#allocation7 + $0x2d]]
    %v368 = vstv %s367
    %v369 = vadd.f32 %v366, %v368
    %v370 = vmax.f32 %v363, %v369
    %s371 = sld [smem:[#allocation2 + $0x2e]]
    %v372 = vstv %s371
    %v373 = vmul.f32 %v50, %v372
    %s374 = sld [smem:[#allocation7 + $0x2e]]
    %v375 = vstv %s374
    %v376 = vadd.f32 %v373, %v375
    %v377 = vmax.f32 %v370, %v376
    %s378 = sld [smem:[#allocation2 + $0x2f]]
    %v379 = vstv %s378
    %v380 = vmul.f32 %v50, %v379
    %s381 = sld [smem:[#allocation7 + $0x2f]]
    %v382 = vstv %s381
    %v383 = vadd.f32 %v380, %v382
    %v384 = vmax.f32 %v377, %v383
    %s385 = sld [smem:[#allocation2 + $0x30]]
    %v386 = vstv %s385
    %v387 = vmul.f32 %v50, %v386
    %s388 = sld [smem:[#allocation7 + $0x30]]
    %v389 = vstv %s388
    %v390 = vadd.f32 %v387, %v389
    %v391 = vmax.f32 %v384, %v390
    %s392 = sld [smem:[#allocation2 + $0x31]]
    %v393 = vstv %s392
    %v394 = vmul.f32 %v50, %v393
    %s395 = sld [smem:[#allocation7 + $0x31]]
    %v396 = vstv %s395
    %v397 = vadd.f32 %v394, %v396
    %v398 = vmax.f32 %v391, %v397
    %v399 = vmin.f32 %v329, %v398
    %s400 = sld [smem:[#allocation2 + $0x32]]
    %v401 = vstv %s400
    %v402 = vmul.f32 %v50, %v401
    %s403 = sld [smem:[#allocation7 + $0x32]]
    %v404 = vstv %s403
    %v405 = vadd.f32 %v402, %v404
    %s406 = sld [smem:[#allocation2 + $0x33]]
    %v407 = vstv %s406
    %v408 = vmul.f32 %v50, %v407
    %s409 = sld [smem:[#allocation7 + $0x33]]
    %v410 = vstv %s409
    %v411 = vadd.f32 %v408, %v410
    %v412 = vmax.f32 %v405, %v411
    %s413 = sld [smem:[#allocation2 + $0x34]]
    %v414 = vstv %s413
    %v415 = vmul.f32 %v50, %v414
    %s416 = sld [smem:[#allocation7 + $0x34]]
    %v417 = vstv %s416
    %v418 = vadd.f32 %v415, %v417
    %v419 = vmax.f32 %v412, %v418
    %s420 = sld [smem:[#allocation2 + $0x35]]
    %v421 = vstv %s420
    %v422 = vmul.f32 %v50, %v421
    %s423 = sld [smem:[#allocation7 + $0x35]]
    %v424 = vstv %s423
    %v425 = vadd.f32 %v422, %v424
    %v426 = vmax.f32 %v419, %v425
    %s427 = sld [smem:[#allocation2 + $0x36]]
    %v428 = vstv %s427
    %v429 = vmul.f32 %v50, %v428
    %s430 = sld [smem:[#allocation7 + $0x36]]
    %v431 = vstv %s430
    %v432 = vadd.f32 %v429, %v431
    %v433 = vmax.f32 %v426, %v432
    %s434 = sld [smem:[#allocation2 + $0x37]]
    %v435 = vstv %s434
    %v436 = vmul.f32 %v50, %v435
    %s437 = sld [smem:[#allocation7 + $0x37]]
    %v438 = vstv %s437
    %v439 = vadd.f32 %v436, %v438
    %v440 = vmax.f32 %v433, %v439
    %s441 = sld [smem:[#allocation2 + $0x38]]
    %v442 = vstv %s441
    %v443 = vmul.f32 %v50, %v442
    %s444 = sld [smem:[#allocation7 + $0x38]]
    %v445 = vstv %s444
    %v446 = vadd.f32 %v443, %v445
    %v447 = vmax.f32 %v440, %v446
    %s448 = sld [smem:[#allocation2 + $0x39]]
    %v449 = vstv %s448
    %v450 = vmul.f32 %v50, %v449
    %s451 = sld [smem:[#allocation7 + $0x39]]
    %v452 = vstv %s451
    %v453 = vadd.f32 %v450, %v452
    %v454 = vmax.f32 %v447, %v453
    %s455 = sld [smem:[#allocation2 + $0x3a]]
    %v456 = vstv %s455
    %v457 = vmul.f32 %v50, %v456
    %s458 = sld [smem:[#allocation7 + $0x3a]]
    %v459 = vstv %s458
    %v460 = vadd.f32 %v457, %v459
    %v461 = vmax.f32 %v454, %v460
    %s462 = sld [smem:[#allocation2 + $0x3b]]
    %v463 = vstv %s462
    %v464 = vmul.f32 %v50, %v463
    %s465 = sld [smem:[#allocation7 + $0x3b]]
    %v466 = vstv %s465
    %v467 = vadd.f32 %v464, %v466
    %v468 = vmax.f32 %v461, %v467
    %v469 = vmin.f32 %v399, %v468
    %s470 = sld [smem:[#allocation2 + $0x3c]]
    %v471 = vstv %s470
    %v472 = vmul.f32 %v50, %v471
    %s473 = sld [smem:[#allocation7 + $0x3c]]
    %v474 = vstv %s473
    %v475 = vadd.f32 %v472, %v474
    %s476 = sld [smem:[#allocation2 + $0x3d]]
    %v477 = vstv %s476
    %v478 = vmul.f32 %v50, %v477
    %s479 = sld [smem:[#allocation7 + $0x3d]]
    %v480 = vstv %s479
    %v481 = vadd.f32 %v478, %v480
    %v482 = vmax.f32 %v475, %v481
    %s483 = sld [smem:[#allocation2 + $0x3e]]
    %v484 = vstv %s483
    %v485 = vmul.f32 %v50, %v484
    %s486 = sld [smem:[#allocation7 + $0x3e]]
    %v487 = vstv %s486
    %v488 = vadd.f32 %v485, %v487
    %v489 = vmax.f32 %v482, %v488
    %s490 = sld [smem:[#allocation2 + $0x3f]]
    %v491 = vstv %s490
    %v492 = vmul.f32 %v50, %v491
    %s493 = sld [smem:[#allocation7 + $0x3f]]
    %v494 = vstv %s493
    %v495 = vadd.f32 %v492, %v494
    %v496 = vmax.f32 %v489, %v495
    %s497 = sld [smem:[#allocation2 + $0x40]]
    %v498 = vstv %s497
    %v499 = vmul.f32 %v50, %v498
    %s500 = sld [smem:[#allocation7 + $0x40]]
    %v501 = vstv %s500
    %v502 = vadd.f32 %v499, %v501
    %v503 = vmax.f32 %v496, %v502
    %s504 = sld [smem:[#allocation2 + $0x41]]
    %v505 = vstv %s504
    %v506 = vmul.f32 %v50, %v505
    %s507 = sld [smem:[#allocation7 + $0x41]]
    %v508 = vstv %s507
    %v509 = vadd.f32 %v506, %v508
    %v510 = vmax.f32 %v503, %v509
    %s511 = sld [smem:[#allocation2 + $0x42]]
    %v512 = vstv %s511
    %v513 = vmul.f32 %v50, %v512
    %s514 = sld [smem:[#allocation7 + $0x42]]
    %v515 = vstv %s514
    %v516 = vadd.f32 %v513, %v515
    %v517 = vmax.f32 %v510, %v516
    %s518 = sld [smem:[#allocation2 + $0x43]]
    %v519 = vstv %s518
    %v520 = vmul.f32 %v50, %v519
    %s521 = sld [smem:[#allocation7 + $0x43]]
    %v522 = vstv %s521
    %v523 = vadd.f32 %v520, %v522
    %v524 = vmax.f32 %v517, %v523
    %s525 = sld [smem:[#allocation2 + $0x44]]
    %v526 = vstv %s525
    %v527 = vmul.f32 %v50, %v526
    %s528 = sld [smem:[#allocation7 + $0x44]]
    %v529 = vstv %s528
    %v530 = vadd.f32 %v527, %v529
    %v531 = vmax.f32 %v524, %v530
    %s532 = sld [smem:[#allocation2 + $0x45]]
    %v533 = vstv %s532
    %v534 = vmul.f32 %v50, %v533
    %s535 = sld [smem:[#allocation7 + $0x45]]
    %v536 = vstv %s535
    %v537 = vadd.f32 %v534, %v536
    %v538 = vmax.f32 %v531, %v537
    %v539 = vmin.f32 %v469, %v538
    %s540 = sld [smem:[#allocation2 + $0x46]]
    %v541 = vstv %s540
    %v542 = vmul.f32 %v50, %v541
    %s543 = sld [smem:[#allocation7 + $0x46]]
    %v544 = vstv %s543
    %v545 = vadd.f32 %v542, %v544
    %s546 = sld [smem:[#allocation2 + $0x47]]
    %v547 = vstv %s546
    %v548 = vmul.f32 %v50, %v547
    %s549 = sld [smem:[#allocation7 + $0x47]]
    %v550 = vstv %s549
    %v551 = vadd.f32 %v548, %v550
    %v552 = vmax.f32 %v545, %v551
    %s553 = sld [smem:[#allocation2 + $0x48]]
    %v554 = vstv %s553
    %v555 = vmul.f32 %v50, %v554
    %s556 = sld [smem:[#allocation7 + $0x48]]
    %v557 = vstv %s556
    %v558 = vadd.f32 %v555, %v557
    %v559 = vmax.f32 %v552, %v558
    %s560 = sld [smem:[#allocation2 + $0x49]]
    %v561 = vstv %s560
    %v562 = vmul.f32 %v50, %v561
    %s563 = sld [smem:[#allocation7 + $0x49]]
    %v564 = vstv %s563
    %v565 = vadd.f32 %v562, %v564
    %v566 = vmax.f32 %v559, %v565
    %s567 = sld [smem:[#allocation2 + $0x4a]]
    %v568 = vstv %s567
    %v569 = vmul.f32 %v50, %v568
    %s570 = sld [smem:[#allocation7 + $0x4a]]
    %v571 = vstv %s570
    %v572 = vadd.f32 %v569, %v571
    %v573 = vmax.f32 %v566, %v572
    %s574 = sld [smem:[#allocation2 + $0x4b]]
    %v575 = vstv %s574
    %v576 = vmul.f32 %v50, %v575
    %s577 = sld [smem:[#allocation7 + $0x4b]]
    %v578 = vstv %s577
    %v579 = vadd.f32 %v576, %v578
    %v580 = vmax.f32 %v573, %v579
    %s581 = sld [smem:[#allocation2 + $0x4c]]
    %v582 = vstv %s581
    %v583 = vmul.f32 %v50, %v582
    %s584 = sld [smem:[#allocation7 + $0x4c]]
    %v585 = vstv %s584
    %v586 = vadd.f32 %v583, %v585
    %v587 = vmax.f32 %v580, %v586
    %s588 = sld [smem:[#allocation2 + $0x4d]]
    %v589 = vstv %s588
    %v590 = vmul.f32 %v50, %v589
    %s591 = sld [smem:[#allocation7 + $0x4d]]
    %v592 = vstv %s591
    %v593 = vadd.f32 %v590, %v592
    %v594 = vmax.f32 %v587, %v593
    %s595 = sld [smem:[#allocation2 + $0x4e]]
    %v596 = vstv %s595
    %v597 = vmul.f32 %v50, %v596
    %s598 = sld [smem:[#allocation7 + $0x4e]]
    %v599 = vstv %s598
    %v600 = vadd.f32 %v597, %v599
    %v601 = vmax.f32 %v594, %v600
    %s602 = sld [smem:[#allocation2 + $0x4f]]
    %v603 = vstv %s602
    %v604 = vmul.f32 %v50, %v603
    %s605 = sld [smem:[#allocation7 + $0x4f]]
    %v606 = vstv %s605
    %v607 = vadd.f32 %v604, %v606
    %v608 = vmax.f32 %v601, %v607
    %v609 = vmin.f32 %v539, %v608
    %s610 = sld [smem:[#allocation2 + $0x50]]
    %v611 = vstv %s610
    %v612 = vmul.f32 %v50, %v611
    %s613 = sld [smem:[#allocation7 + $0x50]]
    %v614 = vstv %s613
    %v615 = vadd.f32 %v612, %v614
    %s616 = sld [smem:[#allocation2 + $0x51]]
    %v617 = vstv %s616
    %v618 = vmul.f32 %v50, %v617
    %s619 = sld [smem:[#allocation7 + $0x51]]
    %v620 = vstv %s619
    %v621 = vadd.f32 %v618, %v620
    %v622 = vmax.f32 %v615, %v621
    %s623 = sld [smem:[#allocation2 + $0x52]]
    %v624 = vstv %s623
    %v625 = vmul.f32 %v50, %v624
    %s626 = sld [smem:[#allocation7 + $0x52]]
    %v627 = vstv %s626
    %v628 = vadd.f32 %v625, %v627
    %v629 = vmax.f32 %v622, %v628
    %s630 = sld [smem:[#allocation2 + $0x53]]
    %v631 = vstv %s630
    %v632 = vmul.f32 %v50, %v631
    %s633 = sld [smem:[#allocation7 + $0x53]]
    %v634 = vstv %s633
    %v635 = vadd.f32 %v632, %v634
    %v636 = vmax.f32 %v629, %v635
    %s637 = sld [smem:[#allocation2 + $0x54]]
    %v638 = vstv %s637
    %v639 = vmul.f32 %v50, %v638
    %s640 = sld [smem:[#allocation7 + $0x54]]
    %v641 = vstv %s640
    %v642 = vadd.f32 %v639, %v641
    %v643 = vmax.f32 %v636, %v642
    %s644 = sld [smem:[#allocation2 + $0x55]]
    %v645 = vstv %s644
    %v646 = vmul.f32 %v50, %v645
    %s647 = sld [smem:[#allocation7 + $0x55]]
    %v648 = vstv %s647
    %v649 = vadd.f32 %v646, %v648
    %v650 = vmax.f32 %v643, %v649
    %s651 = sld [smem:[#allocation2 + $0x56]]
    %v652 = vstv %s651
    %v653 = vmul.f32 %v50, %v652
    %s654 = sld [smem:[#allocation7 + $0x56]]
    %v655 = vstv %s654
    %v656 = vadd.f32 %v653, %v655
    %v657 = vmax.f32 %v650, %v656
    %s658 = sld [smem:[#allocation2 + $0x57]]
    %v659 = vstv %s658
    %v660 = vmul.f32 %v50, %v659
    %s661 = sld [smem:[#allocation7 + $0x57]]
    %v662 = vstv %s661
    %v663 = vadd.f32 %v660, %v662
    %v664 = vmax.f32 %v657, %v663
    %s665 = sld [smem:[#allocation2 + $0x58]]
    %v666 = vstv %s665
    %v667 = vmul.f32 %v50, %v666
    %s668 = sld [smem:[#allocation7 + $0x58]]
    %v669 = vstv %s668
    %v670 = vadd.f32 %v667, %v669
    %v671 = vmax.f32 %v664, %v670
    %s672 = sld [smem:[#allocation2 + $0x59]]
    %v673 = vstv %s672
    %v674 = vmul.f32 %v50, %v673
    %s675 = sld [smem:[#allocation7 + $0x59]]
    %v676 = vstv %s675
    %v677 = vadd.f32 %v674, %v676
    %v678 = vmax.f32 %v671, %v677
    %v679 = vmin.f32 %v609, %v678
    %680 = vst [vmem:[#allocation9] sm:$0xff] %v679
    // Predicated region
    $region26: #{tpu_custom_call.1} parent=1 // pred_check
      _
    $region27: #{tpu_custom_call.1} parent=1 // pred_check_branch
      %682 = sbr.rel (0) target = $region29
    $region28: #{tpu_custom_call.1} parent=1 // pred_region
      %s684 = ssub.s32 128, 128
      %685 = vsyncadd [#allocation4], %s684
      %s687 = sshll.u32 [#allocation9], 4
      %s688 = int_to_ptr.vmem [resolvable:$true] %s687
      %690 = dma.vmem_to_hbm [thread:$0]  %s688, 128, %s3, [#allocation4]
    $region29: #{tpu_custom_call.1} parent=1 // pred_fallthru
      _
    // Predicated region
    $region30: #{tpu_custom_call.1} parent=1 // pred_check
      _
    $region31: #{tpu_custom_call.1} parent=1 // pred_check_branch
      %692 = sbr.rel (0) target = $region33
    $region32: #{tpu_custom_call.1} parent=1 // pred_region
      %693 = dma.done [#allocation4], 128
    $region33: #{tpu_custom_call.1} parent=1 // pred_fallthru
      _
    %694 = vsyncpa [#allocation3], 1
    %695 = vsyncpa [#allocation4], 1
    %696 = vsyncpa [#allocation5], 1
    %697 = vsyncpa [#allocation6], 1

</llo_original>
